<compile_context>
chip_gen: v6e
topology: v6e:2x2x1
jax: 0.10.0
libtpu: 0.0.40
codegen_flags: <defaults>
</compile_context>

<pallas_src>
import jax
import jax.numpy as jnp
from jax import lax
from jax.experimental import pallas as pl
from jax.experimental.pallas import tpu as pltpu

BN_EPS = 1e-5


# --------------------------------------------------------------------------
# Fused Pallas kernel: grid = (batch, row-tiles), both axes parallel.
# --------------------------------------------------------------------------
def bottleneck_kernel(xt_ref, xs_ref, xb_ref, w1_ref, w2_ref, w3_ref,
                      s1_ref, b1_ref, s2_ref, b2_ref, s3_ref, b3_ref,
                      o_ref, im_ref):
    TH, W, C = xs_ref.shape            # row slab produced this step
    P = w1_ref.shape[1]                # planes
    t = pl.program_id(1)
    nt = pl.num_programs(1)

    def conv1_im2col(x2d):
        """1x1 conv + bn1 + relu, expanded to im2col-along-dx layout.

        x2d: (M, C) bf16 rows (M a multiple of W for the slab, or W for a
        single halo row).  Returns (M, 3P) bf16 where channels
          [0:P]   hold h1 shifted right by one column  (dx = 0 window),
          [P:2P]  hold h1 itself                       (dx = 1 window),
          [2P:3P] hold h1 shifted left by one column   (dx = 2 window),
        with zeros shifted into the edge columns (the 3x3-conv padding).
        """
        m = x2d.shape[0]
        h = jnp.dot(x2d, w1_ref[...], preferred_element_type=jnp.float32)
        h = jnp.maximum(h * s1_ref[...] + b1_ref[...], 0.0)       # (M, P) f32
        col = lax.broadcasted_iota(jnp.int32, (m, 1), 0) % W      # column index
        left = jnp.where(col > 0, pltpu.roll(h, 1, axis=0), 0.0)
        right = jnp.where(col < W - 1, pltpu.roll(h, m - 1, axis=0), 0.0)
        return jnp.concatenate([left, h, right], axis=-1).astype(im_ref.dtype)

    # ---- conv1 + bn1 + relu for the TH slab rows + 2 halo rows -> im2col ----
    im_ref[pl.ds(1, TH)] = conv1_im2col(
        xs_ref[...].reshape(TH * W, C)).reshape(TH, W, 3 * P)

    zero_row = jnp.zeros((W, 3 * P), im_ref.dtype)

    @pl.when(t == 0)                   # image top border -> padded row is zero
    def _():
        im_ref[0] = zero_row

    @pl.when(t > 0)
    def _():
        im_ref[0] = conv1_im2col(xt_ref[...])

    @pl.when(t == nt - 1)              # image bottom border
    def _():
        im_ref[TH + 1] = zero_row

    @pl.when(t < nt - 1)
    def _():
        im_ref[TH + 1] = conv1_im2col(xb_ref[...])

    # ---- conv2 (3x3, pad=1, stride=1): 3 accumulating matmuls, K = 3P ----
    acc = jnp.dot(im_ref[pl.ds(0, TH)].reshape(TH * W, 3 * P), w2_ref[0],
                  preferred_element_type=jnp.float32)
    acc += jnp.dot(im_ref[pl.ds(1, TH)].reshape(TH * W, 3 * P), w2_ref[1],
                   preferred_element_type=jnp.float32)
    acc += jnp.dot(im_ref[pl.ds(2, TH)].reshape(TH * W, 3 * P), w2_ref[2],
                   preferred_element_type=jnp.float32)
    h2 = jnp.maximum(acc * s2_ref[...] + b2_ref[...], 0.0).astype(w3_ref.dtype)

    # ---- conv3 (1x1) + bn3 + residual add + relu ----
    h3 = jnp.dot(h2, w3_ref[...], preferred_element_type=jnp.float32)  # (TH*W, 4P)
    out = (h3 * s3_ref[...] + b3_ref[...]).reshape(TH, W, C)
    out = out + xs_ref[...].astype(jnp.float32)
    o_ref[...] = jnp.maximum(out, 0.0).astype(o_ref.dtype)


def _pick_tile_h(H):
    for th in (32, 16, 8):
        if H % th == 0 and H // th >= 2:
            return th
    return H


def bottleneck_forward(x_nchw, params, tile_h=None):
    """x_nchw: (N, C, H, W).  Returns (N, C, H, W) in the input dtype."""
    w1, w2r, w3, s1, b1, s2, b2, s3, b3 = params
    N, C, H, W = x_nchw.shape
    P = w1.shape[1]
    assert C == 4 * P, "identity residual requires inplanes == 4 * planes"

    if tile_h is None:
        tile_h = _pick_tile_h(H)
    assert H % tile_h == 0
    n_tiles = H // tile_h

    # NCHW -> NHWC, bf16 at the kernel boundary.  When chaining Bottleneck
    # blocks, keep activations NHWC/bf16 between blocks and only convert at
    # network boundaries (each transpose here is an extra full HBM pass).
    x_nhwc = jnp.transpose(x_nchw, (0, 2, 3, 1)).astype(jnp.bfloat16)

    def resident(a):   # full-array block, constant index map -> stays in VMEM
        return pl.BlockSpec(a.shape, lambda b, t: (0,) * a.ndim)

    x_slab_spec = pl.BlockSpec((None, tile_h, W, C), lambda b, t: (b, t, 0, 0))
    # 1-row halo blocks above/below the slab, clamped at the image border;
    # the kernel substitutes zeros for the clamped duplicates.
    x_top_spec = pl.BlockSpec(
        (None, None, W, C),
        lambda b, t: (b, jnp.maximum(t * tile_h - 1, 0), 0, 0))
    x_bot_spec = pl.BlockSpec(
        (None, None, W, C),
        lambda b, t: (b, jnp.minimum((t + 1) * tile_h, H - 1), 0, 0))

    out_nhwc = pl.pallas_call(
        bottleneck_kernel,
        out_shape=jax.ShapeDtypeStruct((N, H, W, C), jnp.bfloat16),
        grid_spec=pltpu.PrefetchScalarGridSpec(
            num_scalar_prefetch=0,
            grid=(N, n_tiles),
            in_specs=[
                x_top_spec, x_slab_spec, x_bot_spec,
                resident(w1), resident(w2r), resident(w3),
                resident(s1), resident(b1),
                resident(s2), resident(b2),
                resident(s3), resident(b3),
            ],
            out_specs=pl.BlockSpec((None, tile_h, W, C),
                                   lambda b, t: (b, t, 0, 0)),
            scratch_shapes=[
                # per-tile im2col conv1 activation: (TILE_H + 2 halo rows, W, 3P)
                pltpu.VMEM((tile_h + 2, W, 3 * P), jnp.bfloat16),
            ],
        ),
        compiler_params=pltpu.CompilerParams(
            dimension_semantics=("parallel", "parallel"),
            vmem_limit_bytes=48 * 1024 * 1024),
    )(x_nhwc, x_nhwc, x_nhwc, w1, w2r, w3, s1, b1, s2, b2, s3, b3)

    return jnp.transpose(out_nhwc, (0, 3, 1, 2)).astype(x_nchw.dtype)


# --------------------------------------------------------------------------
# Deterministic parameter construction (PyTorch layouts -> kernel layouts)
# --------------------------------------------------------------------------
def make_params(key, inplanes, planes):
    exp = 4
    ks = jax.random.split(key, 15)
    # PyTorch conv weights: (out, in, kh, kw)
    w1_t = jax.random.normal(ks[0], (planes, inplanes, 1, 1), jnp.float32) * 0.1
    w2_t = jax.random.normal(ks[1], (planes, planes, 3, 3), jnp.float32) * 0.1
    w3_t = jax.random.normal(ks[2], (planes * exp, planes, 1, 1), jnp.float32) * 0.1

    def bn(kg, kb, km, kv, c):
        gamma = jax.random.uniform(kg, (c,), jnp.float32, 0.5, 1.5)
        beta = jax.random.normal(kb, (c,), jnp.float32) * 0.1
        mean = jax.random.normal(km, (c,), jnp.float32) * 0.1
        var = jax.random.uniform(kv, (c,), jnp.float32, 0.5, 1.5)
        return gamma, beta, mean, var

    bn1 = bn(ks[3], ks[4], ks[5], ks[6], planes)
    bn2 = bn(ks[7], ks[8], ks[9], ks[10], planes)
    bn3 = bn(ks[11], ks[12], ks[13], ks[14], planes * exp)

    def fold(gamma, beta, mean, var):
        scale = gamma / jnp.sqrt(var + BN_EPS)
        bias = beta - mean * scale
        return scale.reshape(1, -1), bias.reshape(1, -1)   # f32, kept f32 in-kernel

    s1, b1 = fold(*bn1)
    s2, b2 = fold(*bn2)
    s3, b3 = fold(*bn3)

    # Kernel-layout weights (all reshaping hoisted here), bf16 for the MXU.
    # w2r[dy][dx*P + cin, cout] = w2_t[cout, cin, dy, dx]  -> matches the
    # im2col channel layout [left | center | right] written by the kernel.
    w1 = jnp.transpose(w1_t[:, :, 0, 0]).astype(jnp.bfloat16)           # (Cin, P)
    w2r = (jnp.transpose(w2_t, (2, 3, 1, 0))                            # (3,3,Pin,Pout)
           .reshape(3, 3 * planes, planes)                              # (3, 3P, Pout)
           .astype(jnp.bfloat16))
    w3 = jnp.transpose(w3_t[:, :, 0, 0]).astype(jnp.bfloat16)           # (P, 4P)

    torch_layout = (w1_t, w2_t, w3_t, bn1, bn2, bn3)
    kernel_params = (w1, w2r, w3, s1, b1, s2, b2, s3, b3)
    return kernel_params, torch_layout


# --------------------------------------------------------------------------
# Pure-JAX reference (NCHW, f32, lax.conv) for correctness verification
# --------------------------------------------------------------------------
def reference_forward(x, torch_layout):
    w1_t, w2_t, w3_t, bn1, bn2, bn3 = torch_layout
    dn = ("NCHW", "OIHW", "NCHW")

    def conv(x, w, pad):
        return lax.conv_general_dilated(x, w, (1, 1), [(pad, pad), (pad, pad)],
                                        dimension_numbers=dn)

    def bn(x, p):
        gamma, beta, mean, var = p
        sh = (1, -1, 1, 1)
        return (x - mean.reshape(sh)) / jnp.sqrt(var.reshape(sh) + BN_EPS) \
            * gamma.reshape(sh) + beta.reshape(sh)

    out = jax.nn.relu(bn(conv(x, w1_t, 0), bn1))
    out = jax.nn.relu(bn(conv(out, w2_t, 1), bn2))
    out = bn(conv(out, w3_t, 0), bn3)
    return jax.nn.relu(out + x)


if __name__ == "__main__":
    key = jax.random.PRNGKey(0)
    k_x, k_p = jax.random.split(key)

    batch, planes = 2, 4
    inplanes = planes * 4          # 16 — required for identity residual
    H = W = 16                     # small test shapes; deploy with C a multiple of 128

    x = jax.random.normal(k_x, (batch, inplanes, H, W), jnp.float32)
    kernel_params, torch_layout = make_params(k_p, inplanes, planes)

    out = bottleneck_forward(x, kernel_params)
    out = jax.block_until_ready(out)

    ref = jax.block_until_ready(reference_forward(x, torch_layout))
    assert out.shape == (batch, inplanes, H, W)
    # bf16 I/O + bf16 MXU inputs (f32 accumulation) -> loosened tolerance.
    assert jnp.allclose(out, ref, rtol=5e-2, atol=5e-2), \
        f"max abs err {jnp.max(jnp.abs(out - ref))}"

    print("KERNEL_OK")
</pallas_src>

<mosaic_0001>
module attributes {stable_mosaic.version = 11 : i64} {
  func.func @bottleneck_kernel(%arg0: i32, %arg1: i32, %arg2: memref<1x1x16x16xbf16, #tpu.memory_space<vmem>>, %arg3: memref<1x8x16x16xbf16, #tpu.memory_space<vmem>>, %arg4: memref<1x1x16x16xbf16, #tpu.memory_space<vmem>>, %arg5: memref<16x4xbf16, #tpu.memory_space<vmem>>, %arg6: memref<3x12x4xbf16, #tpu.memory_space<vmem>>, %arg7: memref<4x16xbf16, #tpu.memory_space<vmem>>, %arg8: memref<1x4xf32, #tpu.memory_space<vmem>>, %arg9: memref<1x4xf32, #tpu.memory_space<vmem>>, %arg10: memref<1x4xf32, #tpu.memory_space<vmem>>, %arg11: memref<1x4xf32, #tpu.memory_space<vmem>>, %arg12: memref<1x16xf32, #tpu.memory_space<vmem>>, %arg13: memref<1x16xf32, #tpu.memory_space<vmem>>, %arg14: memref<1x8x16x16xbf16, #tpu.memory_space<vmem>>, %arg15: memref<10x16x12xbf16, #tpu.memory_space<vmem>>) attributes {dimension_semantics = [#tpu.dimension_semantics<parallel>, #tpu.dimension_semantics<parallel>], iteration_bounds = array<i64: 2, 2>, scalar_prefetch = 0 : i64, scratch_operands = 1 : i64, tpu.core_type = #tpu.core_type<tc>, window_params = [{transform_indices = @transform_0, window_bounds = array<i64: 1, 1, 16, 16>}, {transform_indices = @transform_1, window_bounds = array<i64: 1, 8, 16, 16>}, {transform_indices = @transform_2, window_bounds = array<i64: 1, 1, 16, 16>}, {pipeline_mode = #tpu.pipeline_mode<synchronous>, transform_indices = @transform_3, window_bounds = array<i64: 16, 4>}, {pipeline_mode = #tpu.pipeline_mode<synchronous>, transform_indices = @transform_4, window_bounds = array<i64: 3, 12, 4>}, {pipeline_mode = #tpu.pipeline_mode<synchronous>, transform_indices = @transform_5, window_bounds = array<i64: 4, 16>}, {pipeline_mode = #tpu.pipeline_mode<synchronous>, transform_indices = @transform_6, window_bounds = array<i64: 1, 4>}, {pipeline_mode = #tpu.pipeline_mode<synchronous>, transform_indices = @transform_7, window_bounds = array<i64: 1, 4>}, {pipeline_mode = #tpu.pipeline_mode<synchronous>, transform_indices = @transform_8, window_bounds = array<i64: 1, 4>}, {pipeline_mode = #tpu.pipeline_mode<synchronous>, transform_indices = @transform_9, window_bounds = array<i64: 1, 4>}, {pipeline_mode = #tpu.pipeline_mode<synchronous>, transform_indices = @transform_10, window_bounds = array<i64: 1, 16>}, {pipeline_mode = #tpu.pipeline_mode<synchronous>, transform_indices = @transform_11, window_bounds = array<i64: 1, 16>}, {transform_indices = @transform_12, window_bounds = array<i64: 1, 8, 16, 16>}]} {
    %c0 = arith.constant 0 : index
    %c0_0 = arith.constant 0 : index
    %c0_1 = arith.constant 0 : index
    %c0_2 = arith.constant 0 : index
    %0 = vector.load %arg3[%c0, %c0_0, %c0_1, %c0_2] : memref<1x8x16x16xbf16, #tpu.memory_space<vmem>>, vector<1x8x16x16xbf16>
    %1 = vector.shape_cast %0 : vector<1x8x16x16xbf16> to vector<8x16x16xbf16>
    %2 = vector.shape_cast %1 : vector<8x16x16xbf16> to vector<128x16xbf16>
    %c0_3 = arith.constant 0 : index
    %c0_4 = arith.constant 0 : index
    %3 = vector.load %arg5[%c0_3, %c0_4] : memref<16x4xbf16, #tpu.memory_space<vmem>>, vector<16x4xbf16>
    %cst = arith.constant dense<0.000000e+00> : vector<128x4xf32>
    %4 = tpu.matmul %2, %3, %cst {dimension_numbers = #tpu.dot_dimension_numbers<[1], [0], [0], [1], [0, 0, 1, 1], [], []>} : vector<128x16xbf16>, vector<16x4xbf16>, vector<128x4xf32> -> vector<128x4xf32>
    %c0_5 = arith.constant 0 : index
    %c0_6 = arith.constant 0 : index
    %5 = vector.load %arg8[%c0_5, %c0_6] : memref<1x4xf32, #tpu.memory_space<vmem>>, vector<1x4xf32>
    %6 = vector.broadcast %5 : vector<1x4xf32> to vector<128x4xf32>
    %7 = arith.mulf %4, %6 : vector<128x4xf32>
    %c0_7 = arith.constant 0 : index
    %c0_8 = arith.constant 0 : index
    %8 = vector.load %arg9[%c0_7, %c0_8] : memref<1x4xf32, #tpu.memory_space<vmem>>, vector<1x4xf32>
    %9 = vector.broadcast %8 : vector<1x4xf32> to vector<128x4xf32>
    %10 = arith.addf %7, %9 : vector<128x4xf32>
    %cst_9 = arith.constant 0.000000e+00 : f32
    %11 = vector.broadcast %cst_9 : f32 to vector<128x4xf32>
    %12 = arith.maximumf %10, %11 : vector<128x4xf32>
    %13 = tpu.iota {dimensions = array<i32: 0>} : vector<128x1xi32>
    %c16_i32 = arith.constant 16 : i32
    %c0_i32 = arith.constant 0 : i32
    %14 = arith.cmpi eq, %c16_i32, %c0_i32 : i32
    %c1_i32 = arith.constant 1 : i32
    %15 = arith.select %14, %c1_i32, %c16_i32 : i32
    %16 = vector.broadcast %15 : i32 to vector<128x1xi32>
    %17 = arith.remsi %13, %16 : vector<128x1xi32>
    %c0_i32_10 = arith.constant 0 : i32
    %18 = vector.broadcast %c0_i32_10 : i32 to vector<128x1xi32>
    %19 = arith.cmpi ne, %17, %18 : vector<128x1xi32>
    %c0_i32_11 = arith.constant 0 : i32
    %20 = vector.broadcast %c0_i32_11 : i32 to vector<128x1xi32>
    %21 = arith.cmpi slt, %17, %20 : vector<128x1xi32>
    %c0_i32_12 = arith.constant 0 : i32
    %22 = arith.cmpi slt, %15, %c0_i32_12 : i32
    %23 = vector.broadcast %22 : i1 to vector<128x1xi1>
    %24 = vector.broadcast %23 : vector<128x1xi1> to vector<128x1xi1>
    %25 = arith.xori %21, %24 : vector<128x1xi1>
    %26 = arith.andi %25, %19 : vector<128x1xi1>
    %27 = vector.broadcast %15 : i32 to vector<128x1xi32>
    %28 = arith.addi %17, %27 : vector<128x1xi32>
    %29 = arith.select %26, %28, %17 : vector<128x1xi1>, vector<128x1xi32>
    %c0_i32_13 = arith.constant 0 : i32
    %30 = vector.broadcast %c0_i32_13 : i32 to vector<128x1xi32>
    %31 = arith.cmpi sgt, %29, %30 : vector<128x1xi32>
    %c1_i32_14 = arith.constant 1 : i32
    %32 = tpu.dynamic_rotate %12 by %c1_i32_14 dim 0 : vector<128x4xf32>, i32 -> vector<128x4xf32>
    %cst_15 = arith.constant 0.000000e+00 : f32
    %33 = vector.shape_cast %31 : vector<128x1xi1> to vector<128x1xi1>
    %34 = vector.broadcast %33 : vector<128x1xi1> to vector<128x4xi1>
    %35 = vector.broadcast %cst_15 : f32 to vector<128x4xf32>
    %36 = arith.select %34, %32, %35 : vector<128x4xi1>, vector<128x4xf32>
    %c15_i32 = arith.constant 15 : i32
    %37 = vector.broadcast %c15_i32 : i32 to vector<128x1xi32>
    %38 = arith.cmpi slt, %29, %37 : vector<128x1xi32>
    %c127_i32 = arith.constant 127 : i32
    %39 = tpu.dynamic_rotate %12 by %c127_i32 dim 0 : vector<128x4xf32>, i32 -> vector<128x4xf32>
    %cst_16 = arith.constant 0.000000e+00 : f32
    %40 = vector.shape_cast %38 : vector<128x1xi1> to vector<128x1xi1>
    %41 = vector.broadcast %40 : vector<128x1xi1> to vector<128x4xi1>
    %42 = vector.broadcast %cst_16 : f32 to vector<128x4xf32>
    %43 = arith.select %41, %39, %42 : vector<128x4xi1>, vector<128x4xf32>
    %44 = tpu.concatenate %36, %12, %43 in 1 : vector<128x4xf32>, vector<128x4xf32>, vector<128x4xf32> -> vector<128x12xf32>
    %45 = arith.truncf %44 : vector<128x12xf32> to vector<128x12xbf16>
    %46 = vector.shape_cast %45 : vector<128x12xbf16> to vector<8x16x12xbf16>
    %c1 = arith.constant 1 : index
    %c0_17 = arith.constant 0 : index
    %c0_18 = arith.constant 0 : index
    %47 = vector.load %arg15[%c1, %c0_17, %c0_18] : memref<10x16x12xbf16, #tpu.memory_space<vmem>>, vector<8x16x12xbf16>
    tpu.vector_store %arg15[%c1, %c0_17, %c0_18], %46 {strides = array<i32>} : memref<10x16x12xbf16, #tpu.memory_space<vmem>>, vector<8x16x12xbf16>,
    %cst_19 = arith.constant 0.000000e+00 : bf16
    %48 = vector.broadcast %cst_19 : bf16 to vector<16x12xbf16>
    %c0_i32_20 = arith.constant 0 : i32
    %49 = arith.cmpi eq, %arg1, %c0_i32_20 : i32
    %50 = arith.extui %49 : i1 to i32
    %c0_i32_21 = arith.constant 0 : i32
    %51 = arith.cmpi ne, %50, %c0_i32_21 : i32
    scf.if %51 {
      %c0_69 = arith.constant 0 : index
      %c0_70 = arith.constant 0 : index
      %c0_71 = arith.constant 0 : index
      %106 = vector.load %arg15[%c0_69, %c0_70, %c0_71] : memref<10x16x12xbf16, #tpu.memory_space<vmem>>, vector<1x16x12xbf16>
      %107 = vector.shape_cast %106 : vector<1x16x12xbf16> to vector<16x12xbf16>
      %108 = vector.shape_cast %48 : vector<16x12xbf16> to vector<1x16x12xbf16>
      tpu.vector_store %arg15[%c0_69, %c0_70, %c0_71], %108 {strides = array<i32>} : memref<10x16x12xbf16, #tpu.memory_space<vmem>>, vector<1x16x12xbf16>,
    } else {
    }
    %c0_i32_22 = arith.constant 0 : i32
    %52 = arith.cmpi sgt, %arg1, %c0_i32_22 : i32
    %53 = arith.extui %52 : i1 to i32
    %c0_i32_23 = arith.constant 0 : i32
    %54 = arith.cmpi ne, %53, %c0_i32_23 : i32
    scf.if %54 {
      %c0_69 = arith.constant 0 : index
      %c0_70 = arith.constant 0 : index
      %c0_71 = arith.constant 0 : index
      %c0_72 = arith.constant 0 : index
      %106 = vector.load %arg2[%c0_69, %c0_70, %c0_71, %c0_72] : memref<1x1x16x16xbf16, #tpu.memory_space<vmem>>, vector<1x1x16x16xbf16>
      %107 = vector.shape_cast %106 : vector<1x1x16x16xbf16> to vector<16x16xbf16>
      %c0_73 = arith.constant 0 : index
      %c0_74 = arith.constant 0 : index
      %108 = vector.load %arg5[%c0_73, %c0_74] : memref<16x4xbf16, #tpu.memory_space<vmem>>, vector<16x4xbf16>
      %cst_75 = arith.constant dense<0.000000e+00> : vector<16x4xf32>
      %109 = tpu.matmul %107, %108, %cst_75 {dimension_numbers = #tpu.dot_dimension_numbers<[1], [0], [0], [1], [0, 0, 1, 1], [], []>} : vector<16x16xbf16>, vector<16x4xbf16>, vector<16x4xf32> -> vector<16x4xf32>
      %c0_76 = arith.constant 0 : index
      %c0_77 = arith.constant 0 : index
      %110 = vector.load %arg8[%c0_76, %c0_77] : memref<1x4xf32, #tpu.memory_space<vmem>>, vector<1x4xf32>
      %111 = vector.broadcast %110 : vector<1x4xf32> to vector<16x4xf32>
      %112 = arith.mulf %109, %111 : vector<16x4xf32>
      %c0_78 = arith.constant 0 : index
      %c0_79 = arith.constant 0 : index
      %113 = vector.load %arg9[%c0_78, %c0_79] : memref<1x4xf32, #tpu.memory_space<vmem>>, vector<1x4xf32>
      %114 = vector.broadcast %113 : vector<1x4xf32> to vector<16x4xf32>
      %115 = arith.addf %112, %114 : vector<16x4xf32>
      %cst_80 = arith.constant 0.000000e+00 : f32
      %116 = vector.broadcast %cst_80 : f32 to vector<16x4xf32>
      %117 = arith.maximumf %115, %116 : vector<16x4xf32>
      %118 = tpu.iota {dimensions = array<i32: 0>} : vector<16x1xi32>
      %c16_i32_81 = arith.constant 16 : i32
      %c0_i32_82 = arith.constant 0 : i32
      %119 = arith.cmpi eq, %c16_i32_81, %c0_i32_82 : i32
      %c1_i32_83 = arith.constant 1 : i32
      %120 = arith.select %119, %c1_i32_83, %c16_i32_81 : i32
      %121 = vector.broadcast %120 : i32 to vector<16x1xi32>
      %122 = arith.remsi %118, %121 : vector<16x1xi32>
      %c0_i32_84 = arith.constant 0 : i32
      %123 = vector.broadcast %c0_i32_84 : i32 to vector<16x1xi32>
      %124 = arith.cmpi ne, %122, %123 : vector<16x1xi32>
      %c0_i32_85 = arith.constant 0 : i32
      %125 = vector.broadcast %c0_i32_85 : i32 to vector<16x1xi32>
      %126 = arith.cmpi slt, %122, %125 : vector<16x1xi32>
      %c0_i32_86 = arith.constant 0 : i32
      %127 = arith.cmpi slt, %120, %c0_i32_86 : i32
      %128 = vector.broadcast %127 : i1 to vector<16x1xi1>
      %129 = vector.broadcast %128 : vector<16x1xi1> to vector<16x1xi1>
      %130 = arith.xori %126, %129 : vector<16x1xi1>
      %131 = arith.andi %130, %124 : vector<16x1xi1>
      %132 = vector.broadcast %120 : i32 to vector<16x1xi32>
      %133 = arith.addi %122, %132 : vector<16x1xi32>
      %134 = arith.select %131, %133, %122 : vector<16x1xi1>, vector<16x1xi32>
      %c0_i32_87 = arith.constant 0 : i32
      %135 = vector.broadcast %c0_i32_87 : i32 to vector<16x1xi32>
      %136 = arith.cmpi sgt, %134, %135 : vector<16x1xi32>
      %c1_i32_88 = arith.constant 1 : i32
      %137 = tpu.dynamic_rotate %117 by %c1_i32_88 dim 0 : vector<16x4xf32>, i32 -> vector<16x4xf32>
      %cst_89 = arith.constant 0.000000e+00 : f32
      %138 = vector.shape_cast %136 : vector<16x1xi1> to vector<16x1xi1>
      %139 = vector.broadcast %138 : vector<16x1xi1> to vector<16x4xi1>
      %140 = vector.broadcast %cst_89 : f32 to vector<16x4xf32>
      %141 = arith.select %139, %137, %140 : vector<16x4xi1>, vector<16x4xf32>
      %c15_i32_90 = arith.constant 15 : i32
      %142 = vector.broadcast %c15_i32_90 : i32 to vector<16x1xi32>
      %143 = arith.cmpi slt, %134, %142 : vector<16x1xi32>
      %c15_i32_91 = arith.constant 15 : i32
      %144 = tpu.dynamic_rotate %117 by %c15_i32_91 dim 0 : vector<16x4xf32>, i32 -> vector<16x4xf32>
      %cst_92 = arith.constant 0.000000e+00 : f32
      %145 = vector.shape_cast %143 : vector<16x1xi1> to vector<16x1xi1>
      %146 = vector.broadcast %145 : vector<16x1xi1> to vector<16x4xi1>
      %147 = vector.broadcast %cst_92 : f32 to vector<16x4xf32>
      %148 = arith.select %146, %144, %147 : vector<16x4xi1>, vector<16x4xf32>
      %149 = tpu.concatenate %141, %117, %148 in 1 : vector<16x4xf32>, vector<16x4xf32>, vector<16x4xf32> -> vector<16x12xf32>
      %150 = arith.truncf %149 : vector<16x12xf32> to vector<16x12xbf16>
      %c0_93 = arith.constant 0 : index
      %c0_94 = arith.constant 0 : index
      %c0_95 = arith.constant 0 : index
      %151 = vector.load %arg15[%c0_93, %c0_94, %c0_95] : memref<10x16x12xbf16, #tpu.memory_space<vmem>>, vector<1x16x12xbf16>
      %152 = vector.shape_cast %151 : vector<1x16x12xbf16> to vector<16x12xbf16>
      %153 = vector.shape_cast %150 : vector<16x12xbf16> to vector<1x16x12xbf16>
      tpu.vector_store %arg15[%c0_93, %c0_94, %c0_95], %153 {strides = array<i32>} : memref<10x16x12xbf16, #tpu.memory_space<vmem>>, vector<1x16x12xbf16>,
    } else {
    }
    %c1_i32_24 = arith.constant 1 : i32
    %55 = arith.cmpi eq, %arg1, %c1_i32_24 : i32
    %56 = arith.extui %55 : i1 to i32
    %c0_i32_25 = arith.constant 0 : i32
    %57 = arith.cmpi ne, %56, %c0_i32_25 : i32
    scf.if %57 {
      %c9 = arith.constant 9 : index
      %c0_69 = arith.constant 0 : index
      %c0_70 = arith.constant 0 : index
      %106 = vector.load %arg15[%c9, %c0_69, %c0_70] : memref<10x16x12xbf16, #tpu.memory_space<vmem>>, vector<1x16x12xbf16>
      %107 = vector.shape_cast %106 : vector<1x16x12xbf16> to vector<16x12xbf16>
      %108 = vector.shape_cast %48 : vector<16x12xbf16> to vector<1x16x12xbf16>
      tpu.vector_store %arg15[%c9, %c0_69, %c0_70], %108 {strides = array<i32>} : memref<10x16x12xbf16, #tpu.memory_space<vmem>>, vector<1x16x12xbf16>,
    } else {
    }
    %c1_i32_26 = arith.constant 1 : i32
    %58 = arith.cmpi slt, %arg1, %c1_i32_26 : i32
    %59 = arith.extui %58 : i1 to i32
    %c0_i32_27 = arith.constant 0 : i32
    %60 = arith.cmpi ne, %59, %c0_i32_27 : i32
    scf.if %60 {
      %c0_69 = arith.constant 0 : index
      %c0_70 = arith.constant 0 : index
      %c0_71 = arith.constant 0 : index
      %c0_72 = arith.constant 0 : index
      %106 = vector.load %arg4[%c0_69, %c0_70, %c0_71, %c0_72] : memref<1x1x16x16xbf16, #tpu.memory_space<vmem>>, vector<1x1x16x16xbf16>
      %107 = vector.shape_cast %106 : vector<1x1x16x16xbf16> to vector<16x16xbf16>
      %c0_73 = arith.constant 0 : index
      %c0_74 = arith.constant 0 : index
      %108 = vector.load %arg5[%c0_73, %c0_74] : memref<16x4xbf16, #tpu.memory_space<vmem>>, vector<16x4xbf16>
      %cst_75 = arith.constant dense<0.000000e+00> : vector<16x4xf32>
      %109 = tpu.matmul %107, %108, %cst_75 {dimension_numbers = #tpu.dot_dimension_numbers<[1], [0], [0], [1], [0, 0, 1, 1], [], []>} : vector<16x16xbf16>, vector<16x4xbf16>, vector<16x4xf32> -> vector<16x4xf32>
      %c0_76 = arith.constant 0 : index
      %c0_77 = arith.constant 0 : index
      %110 = vector.load %arg8[%c0_76, %c0_77] : memref<1x4xf32, #tpu.memory_space<vmem>>, vector<1x4xf32>
      %111 = vector.broadcast %110 : vector<1x4xf32> to vector<16x4xf32>
      %112 = arith.mulf %109, %111 : vector<16x4xf32>
      %c0_78 = arith.constant 0 : index
      %c0_79 = arith.constant 0 : index
      %113 = vector.load %arg9[%c0_78, %c0_79] : memref<1x4xf32, #tpu.memory_space<vmem>>, vector<1x4xf32>
      %114 = vector.broadcast %113 : vector<1x4xf32> to vector<16x4xf32>
      %115 = arith.addf %112, %114 : vector<16x4xf32>
      %cst_80 = arith.constant 0.000000e+00 : f32
      %116 = vector.broadcast %cst_80 : f32 to vector<16x4xf32>
      %117 = arith.maximumf %115, %116 : vector<16x4xf32>
      %118 = tpu.iota {dimensions = array<i32: 0>} : vector<16x1xi32>
      %c16_i32_81 = arith.constant 16 : i32
      %c0_i32_82 = arith.constant 0 : i32
      %119 = arith.cmpi eq, %c16_i32_81, %c0_i32_82 : i32
      %c1_i32_83 = arith.constant 1 : i32
      %120 = arith.select %119, %c1_i32_83, %c16_i32_81 : i32
      %121 = vector.broadcast %120 : i32 to vector<16x1xi32>
      %122 = arith.remsi %118, %121 : vector<16x1xi32>
      %c0_i32_84 = arith.constant 0 : i32
      %123 = vector.broadcast %c0_i32_84 : i32 to vector<16x1xi32>
      %124 = arith.cmpi ne, %122, %123 : vector<16x1xi32>
      %c0_i32_85 = arith.constant 0 : i32
      %125 = vector.broadcast %c0_i32_85 : i32 to vector<16x1xi32>
      %126 = arith.cmpi slt, %122, %125 : vector<16x1xi32>
      %c0_i32_86 = arith.constant 0 : i32
      %127 = arith.cmpi slt, %120, %c0_i32_86 : i32
      %128 = vector.broadcast %127 : i1 to vector<16x1xi1>
      %129 = vector.broadcast %128 : vector<16x1xi1> to vector<16x1xi1>
      %130 = arith.xori %126, %129 : vector<16x1xi1>
      %131 = arith.andi %130, %124 : vector<16x1xi1>
      %132 = vector.broadcast %120 : i32 to vector<16x1xi32>
      %133 = arith.addi %122, %132 : vector<16x1xi32>
      %134 = arith.select %131, %133, %122 : vector<16x1xi1>, vector<16x1xi32>
      %c0_i32_87 = arith.constant 0 : i32
      %135 = vector.broadcast %c0_i32_87 : i32 to vector<16x1xi32>
      %136 = arith.cmpi sgt, %134, %135 : vector<16x1xi32>
      %c1_i32_88 = arith.constant 1 : i32
      %137 = tpu.dynamic_rotate %117 by %c1_i32_88 dim 0 : vector<16x4xf32>, i32 -> vector<16x4xf32>
      %cst_89 = arith.constant 0.000000e+00 : f32
      %138 = vector.shape_cast %136 : vector<16x1xi1> to vector<16x1xi1>
      %139 = vector.broadcast %138 : vector<16x1xi1> to vector<16x4xi1>
      %140 = vector.broadcast %cst_89 : f32 to vector<16x4xf32>
      %141 = arith.select %139, %137, %140 : vector<16x4xi1>, vector<16x4xf32>
      %c15_i32_90 = arith.constant 15 : i32
      %142 = vector.broadcast %c15_i32_90 : i32 to vector<16x1xi32>
      %143 = arith.cmpi slt, %134, %142 : vector<16x1xi32>
      %c15_i32_91 = arith.constant 15 : i32
      %144 = tpu.dynamic_rotate %117 by %c15_i32_91 dim 0 : vector<16x4xf32>, i32 -> vector<16x4xf32>
      %cst_92 = arith.constant 0.000000e+00 : f32
      %145 = vector.shape_cast %143 : vector<16x1xi1> to vector<16x1xi1>
      %146 = vector.broadcast %145 : vector<16x1xi1> to vector<16x4xi1>
      %147 = vector.broadcast %cst_92 : f32 to vector<16x4xf32>
      %148 = arith.select %146, %144, %147 : vector<16x4xi1>, vector<16x4xf32>
      %149 = tpu.concatenate %141, %117, %148 in 1 : vector<16x4xf32>, vector<16x4xf32>, vector<16x4xf32> -> vector<16x12xf32>
      %150 = arith.truncf %149 : vector<16x12xf32> to vector<16x12xbf16>
      %c9 = arith.constant 9 : index
      %c0_93 = arith.constant 0 : index
      %c0_94 = arith.constant 0 : index
      %151 = vector.load %arg15[%c9, %c0_93, %c0_94] : memref<10x16x12xbf16, #tpu.memory_space<vmem>>, vector<1x16x12xbf16>
      %152 = vector.shape_cast %151 : vector<1x16x12xbf16> to vector<16x12xbf16>
      %153 = vector.shape_cast %150 : vector<16x12xbf16> to vector<1x16x12xbf16>
      tpu.vector_store %arg15[%c9, %c0_93, %c0_94], %153 {strides = array<i32>} : memref<10x16x12xbf16, #tpu.memory_space<vmem>>, vector<1x16x12xbf16>,
    } else {
    }
    %c0_28 = arith.constant 0 : index
    %c0_29 = arith.constant 0 : index
    %c0_30 = arith.constant 0 : index
    %61 = vector.load %arg15[%c0_28, %c0_29, %c0_30] : memref<10x16x12xbf16, #tpu.memory_space<vmem>>, vector<8x16x12xbf16>
    %62 = vector.shape_cast %61 : vector<8x16x12xbf16> to vector<128x12xbf16>
    %c0_31 = arith.constant 0 : index
    %c0_32 = arith.constant 0 : index
    %c0_33 = arith.constant 0 : index
    %63 = vector.load %arg6[%c0_31, %c0_32, %c0_33] : memref<3x12x4xbf16, #tpu.memory_space<vmem>>, vector<1x12x4xbf16>
    %64 = vector.shape_cast %63 : vector<1x12x4xbf16> to vector<12x4xbf16>
    %cst_34 = arith.constant dense<0.000000e+00> : vector<128x4xf32>
    %65 = tpu.matmul %62, %64, %cst_34 {dimension_numbers = #tpu.dot_dimension_numbers<[1], [0], [0], [1], [0, 0, 1, 1], [], []>} : vector<128x12xbf16>, vector<12x4xbf16>, vector<128x4xf32> -> vector<128x4xf32>
    %c1_35 = arith.constant 1 : index
    %c0_36 = arith.constant 0 : index
    %c0_37 = arith.constant 0 : index
    %66 = vector.load %arg15[%c1_35, %c0_36, %c0_37] : memref<10x16x12xbf16, #tpu.memory_space<vmem>>, vector<8x16x12xbf16>
    %67 = vector.shape_cast %66 : vector<8x16x12xbf16> to vector<128x12xbf16>
    %c1_38 = arith.constant 1 : index
    %c0_39 = arith.constant 0 : index
    %c0_40 = arith.constant 0 : index
    %68 = vector.load %arg6[%c1_38, %c0_39, %c0_40] : memref<3x12x4xbf16, #tpu.memory_space<vmem>>, vector<1x12x4xbf16>
    %69 = vector.shape_cast %68 : vector<1x12x4xbf16> to vector<12x4xbf16>
    %cst_41 = arith.constant dense<0.000000e+00> : vector<128x4xf32>
    %70 = tpu.matmul %67, %69, %cst_41 {dimension_numbers = #tpu.dot_dimension_numbers<[1], [0], [0], [1], [0, 0, 1, 1], [], []>} : vector<128x12xbf16>, vector<12x4xbf16>, vector<128x4xf32> -> vector<128x4xf32>
    %71 = arith.addf %65, %70 : vector<128x4xf32>
    %c2 = arith.constant 2 : index
    %c0_42 = arith.constant 0 : index
    %c0_43 = arith.constant 0 : index
    %72 = vector.load %arg15[%c2, %c0_42, %c0_43] : memref<10x16x12xbf16, #tpu.memory_space<vmem>>, vector<8x16x12xbf16>
    %73 = vector.shape_cast %72 : vector<8x16x12xbf16> to vector<128x12xbf16>
    %c2_44 = arith.constant 2 : index
    %c0_45 = arith.constant 0 : index
    %c0_46 = arith.constant 0 : index
    %74 = vector.load %arg6[%c2_44, %c0_45, %c0_46] : memref<3x12x4xbf16, #tpu.memory_space<vmem>>, vector<1x12x4xbf16>
    %75 = vector.shape_cast %74 : vector<1x12x4xbf16> to vector<12x4xbf16>
    %cst_47 = arith.constant dense<0.000000e+00> : vector<128x4xf32>
    %76 = tpu.matmul %73, %75, %cst_47 {dimension_numbers = #tpu.dot_dimension_numbers<[1], [0], [0], [1], [0, 0, 1, 1], [], []>} : vector<128x12xbf16>, vector<12x4xbf16>, vector<128x4xf32> -> vector<128x4xf32>
    %77 = arith.addf %71, %76 : vector<128x4xf32>
    %c0_48 = arith.constant 0 : index
    %c0_49 = arith.constant 0 : index
    %78 = vector.load %arg10[%c0_48, %c0_49] : memref<1x4xf32, #tpu.memory_space<vmem>>, vector<1x4xf32>
    %79 = vector.broadcast %78 : vector<1x4xf32> to vector<128x4xf32>
    %80 = arith.mulf %77, %79 : vector<128x4xf32>
    %c0_50 = arith.constant 0 : index
    %c0_51 = arith.constant 0 : index
    %81 = vector.load %arg11[%c0_50, %c0_51] : memref<1x4xf32, #tpu.memory_space<vmem>>, vector<1x4xf32>
    %82 = vector.broadcast %81 : vector<1x4xf32> to vector<128x4xf32>
    %83 = arith.addf %80, %82 : vector<128x4xf32>
    %cst_52 = arith.constant 0.000000e+00 : f32
    %84 = vector.broadcast %cst_52 : f32 to vector<128x4xf32>
    %85 = arith.maximumf %83, %84 : vector<128x4xf32>
    %86 = arith.truncf %85 : vector<128x4xf32> to vector<128x4xbf16>
    %c0_53 = arith.constant 0 : index
    %c0_54 = arith.constant 0 : index
    %87 = vector.load %arg7[%c0_53, %c0_54] : memref<4x16xbf16, #tpu.memory_space<vmem>>, vector<4x16xbf16>
    %cst_55 = arith.constant dense<0.000000e+00> : vector<128x16xf32>
    %88 = tpu.matmul %86, %87, %cst_55 {dimension_numbers = #tpu.dot_dimension_numbers<[1], [0], [0], [1], [0, 0, 1, 1], [], []>} : vector<128x4xbf16>, vector<4x16xbf16>, vector<128x16xf32> -> vector<128x16xf32>
    %c0_56 = arith.constant 0 : index
    %c0_57 = arith.constant 0 : index
    %89 = vector.load %arg12[%c0_56, %c0_57] : memref<1x16xf32, #tpu.memory_space<vmem>>, vector<1x16xf32>
    %90 = vector.broadcast %89 : vector<1x16xf32> to vector<128x16xf32>
    %91 = arith.mulf %88, %90 : vector<128x16xf32>
    %c0_58 = arith.constant 0 : index
    %c0_59 = arith.constant 0 : index
    %92 = vector.load %arg13[%c0_58, %c0_59] : memref<1x16xf32, #tpu.memory_space<vmem>>, vector<1x16xf32>
    %93 = vector.broadcast %92 : vector<1x16xf32> to vector<128x16xf32>
    %94 = arith.addf %91, %93 : vector<128x16xf32>
    %95 = vector.shape_cast %94 : vector<128x16xf32> to vector<8x16x16xf32>
    %c0_60 = arith.constant 0 : index
    %c0_61 = arith.constant 0 : index
    %c0_62 = arith.constant 0 : index
    %c0_63 = arith.constant 0 : index
    %96 = vector.load %arg3[%c0_60, %c0_61, %c0_62, %c0_63] : memref<1x8x16x16xbf16, #tpu.memory_space<vmem>>, vector<1x8x16x16xbf16>
    %97 = vector.shape_cast %96 : vector<1x8x16x16xbf16> to vector<8x16x16xbf16>
    %98 = arith.extf %97 : vector<8x16x16xbf16> to vector<8x16x16xf32>
    %99 = arith.addf %95, %98 : vector<8x16x16xf32>
    %cst_64 = arith.constant 0.000000e+00 : f32
    %100 = vector.broadcast %cst_64 : f32 to vector<8x16x16xf32>
    %101 = arith.maximumf %99, %100 : vector<8x16x16xf32>
    %102 = arith.truncf %101 : vector<8x16x16xf32> to vector<8x16x16xbf16>
    %c0_65 = arith.constant 0 : index
    %c0_66 = arith.constant 0 : index
    %c0_67 = arith.constant 0 : index
    %c0_68 = arith.constant 0 : index
    %103 = vector.load %arg14[%c0_65, %c0_66, %c0_67, %c0_68] : memref<1x8x16x16xbf16, #tpu.memory_space<vmem>>, vector<1x8x16x16xbf16>
    %104 = vector.shape_cast %103 : vector<1x8x16x16xbf16> to vector<8x16x16xbf16>
    %105 = vector.shape_cast %102 : vector<8x16x16xbf16> to vector<1x8x16x16xbf16>
    tpu.vector_store %arg14[%c0_65, %c0_66, %c0_67, %c0_68], %105 {strides = array<i32>} : memref<1x8x16x16xbf16, #tpu.memory_space<vmem>>, vector<1x8x16x16xbf16>,
    return
  }
  func.func @transform_0(%arg0: i32, %arg1: i32) -> (i32, i32, i32, i32) {
    %c8_i32 = arith.constant 8 : i32
    %0 = arith.muli %arg1, %c8_i32 : i32
    %c1_i32 = arith.constant 1 : i32
    %1 = arith.subi %0, %c1_i32 : i32
    %c0_i32 = arith.constant 0 : i32
    %2 = arith.maxsi %1, %c0_i32 : i32
    %c0_i32_0 = arith.constant 0 : i32
    %c0_i32_1 = arith.constant 0 : i32
    %c0_i32_2 = arith.constant 0 : i32
    return %arg0, %2, %c0_i32_0, %c0_i32_1 : i32, i32, i32, i32
  }
  func.func @transform_1(%arg0: i32, %arg1: i32) -> (i32, i32, i32, i32) {
    %c0_i32 = arith.constant 0 : i32
    %c0_i32_0 = arith.constant 0 : i32
    %c0_i32_1 = arith.constant 0 : i32
    return %arg0, %arg1, %c0_i32, %c0_i32_0 : i32, i32, i32, i32
  }
  func.func @transform_2(%arg0: i32, %arg1: i32) -> (i32, i32, i32, i32) {
    %c1_i32 = arith.constant 1 : i32
    %0 = arith.addi %arg1, %c1_i32 : i32
    %c8_i32 = arith.constant 8 : i32
    %1 = arith.muli %0, %c8_i32 : i32
    %c15_i32 = arith.constant 15 : i32
    %2 = arith.minsi %1, %c15_i32 : i32
    %c0_i32 = arith.constant 0 : i32
    %c0_i32_0 = arith.constant 0 : i32
    %c0_i32_1 = arith.constant 0 : i32
    return %arg0, %2, %c0_i32, %c0_i32_0 : i32, i32, i32, i32
  }
  func.func @transform_3(%arg0: i32, %arg1: i32) -> (i32, i32) {
    %c0_i32 = arith.constant 0 : i32
    %c0_i32_0 = arith.constant 0 : i32
    %c0_i32_1 = arith.constant 0 : i32
    return %c0_i32, %c0_i32_0 : i32, i32
  }
  func.func @transform_4(%arg0: i32, %arg1: i32) -> (i32, i32, i32) {
    %c0_i32 = arith.constant 0 : i32
    %c0_i32_0 = arith.constant 0 : i32
    %c0_i32_1 = arith.constant 0 : i32
    %c0_i32_2 = arith.constant 0 : i32
    return %c0_i32, %c0_i32_0, %c0_i32_1 : i32, i32, i32
  }
  func.func @transform_5(%arg0: i32, %arg1: i32) -> (i32, i32) {
    %c0_i32 = arith.constant 0 : i32
    %c0_i32_0 = arith.constant 0 : i32
    %c0_i32_1 = arith.constant 0 : i32
    return %c0_i32, %c0_i32_0 : i32, i32
  }
  func.func @transform_6(%arg0: i32, %arg1: i32) -> (i32, i32) {
    %c0_i32 = arith.constant 0 : i32
    %c0_i32_0 = arith.constant 0 : i32
    %c0_i32_1 = arith.constant 0 : i32
    return %c0_i32, %c0_i32_0 : i32, i32
  }
  func.func @transform_7(%arg0: i32, %arg1: i32) -> (i32, i32) {
    %c0_i32 = arith.constant 0 : i32
    %c0_i32_0 = arith.constant 0 : i32
    %c0_i32_1 = arith.constant 0 : i32
    return %c0_i32, %c0_i32_0 : i32, i32
  }
  func.func @transform_8(%arg0: i32, %arg1: i32) -> (i32, i32) {
    %c0_i32 = arith.constant 0 : i32
    %c0_i32_0 = arith.constant 0 : i32
    %c0_i32_1 = arith.constant 0 : i32
    return %c0_i32, %c0_i32_0 : i32, i32
  }
  func.func @transform_9(%arg0: i32, %arg1: i32) -> (i32, i32) {
    %c0_i32 = arith.constant 0 : i32
    %c0_i32_0 = arith.constant 0 : i32
    %c0_i32_1 = arith.constant 0 : i32
    return %c0_i32, %c0_i32_0 : i32, i32
  }
  func.func @transform_10(%arg0: i32, %arg1: i32) -> (i32, i32) {
    %c0_i32 = arith.constant 0 : i32
    %c0_i32_0 = arith.constant 0 : i32
    %c0_i32_1 = arith.constant 0 : i32
    return %c0_i32, %c0_i32_0 : i32, i32
  }
  func.func @transform_11(%arg0: i32, %arg1: i32) -> (i32, i32) {
    %c0_i32 = arith.constant 0 : i32
    %c0_i32_0 = arith.constant 0 : i32
    %c0_i32_1 = arith.constant 0 : i32
    return %c0_i32, %c0_i32_0 : i32, i32
  }
  func.func @transform_12(%arg0: i32, %arg1: i32) -> (i32, i32, i32, i32) {
    %c0_i32 = arith.constant 0 : i32
    %c0_i32_0 = arith.constant 0 : i32
    %c0_i32_1 = arith.constant 0 : i32
    return %arg0, %arg1, %c0_i32, %c0_i32_0 : i32, i32, i32, i32
  }
}

</mosaic_0001>

<llo_original>
// kernel: tpu_custom_call.1
$region0: #{tpu_custom_call.1}
  #allocation0 [shape = 'u32[]', space=smem, size = 0x4, offset = 0x4, fixed_abs, tag = 'smem constant byte address 0x4 - core index']
  #allocation1 [shape = 'u32[144,128]{1,0:T(1,128)}', space=vmem, size = 0x12000, scoped, tag = 'internal scratch']
  #allocation2 [shape = 'bf16[10,16,12]{2,1,0:T(8,128)(2,1)}', space=vmem, size = 0xa000, scoped, tag = 'scratch operand']
  %s0 = inlined_call_operand.hbm [shape: bf16[2,16,16,16], index: 0, kind: input, shape index: {}]
  %s1 = inlined_call_operand.hbm [shape: bf16[2,16,16,16], index: 1, kind: input, shape index: {}]
  %s2 = inlined_call_operand.hbm [shape: bf16[2,16,16,16], index: 2, kind: input, shape index: {}]
  %s3 = inlined_call_operand.vmem [shape: bf16[16,4], index: 3, kind: input, shape index: {}]
  %s4 = inlined_call_operand.vmem [shape: bf16[3,12,4], index: 4, kind: input, shape index: {}]
  %s5 = inlined_call_operand.vmem [shape: bf16[4,16], index: 5, kind: input, shape index: {}]
  %s6 = inlined_call_operand.vmem [shape: f32[1,4], index: 6, kind: input, shape index: {}]
  %s7 = inlined_call_operand.vmem [shape: f32[1,4], index: 7, kind: input, shape index: {}]
  %s8 = inlined_call_operand.vmem [shape: f32[1,4], index: 8, kind: input, shape index: {}]
  %s9 = inlined_call_operand.vmem [shape: f32[1,4], index: 9, kind: input, shape index: {}]
  %s10 = inlined_call_operand.vmem [shape: f32[1,16], index: 10, kind: input, shape index: {}]
  %s11 = inlined_call_operand.vmem [shape: f32[1,16], index: 11, kind: input, shape index: {}]
  %s12 = inlined_call_operand.hbm [shape: bf16[2,16,16,16], index: 12, kind: output, shape index: {}]
  %s13 = sld [smem:[#allocation0]]
  $region109: #{tpu_custom_call.1} parent=0
    _
  %s15 = ssub.s32 1, %s13
  %s16 = scalar_select 0, %s15, %s13
  $region1: #{tpu_custom_call.1} parent=0
    #allocation3 [shape = 'u8[8192]{0}', space=vmem, size = 0x2000, scoped, tag = 'input window, operand 0']
    #allocation4 [shape = 's32[2]{0}', space=sflag, size = 0x8, scoped, tag = 'scoped memory for tpu_custom_call.1']
    #allocation5 [shape = 's32[2]{0}', space=sflag, size = 0x8, scoped, tag = 'scoped memory for tpu_custom_call.1']
    #allocation6 [shape = 'u8[65536]{0}', space=vmem, size = 0x10000, scoped, tag = 'input window, operand 1']
    #allocation7 [shape = 's32[2]{0}', space=sflag, size = 0x8, scoped, tag = 'scoped memory for tpu_custom_call.1']
    #allocation8 [shape = 'u8[8192]{0}', space=vmem, size = 0x2000, scoped, tag = 'input window, operand 2']
    #allocation9 [shape = 'u8[65536]{0}', space=vmem, size = 0x10000, scoped, tag = 'output window, operand 0']
    %17 = vsyncpa [#allocation4], 0
    %s18 = scalar_lea.sflag [#allocation4], 1
    %19 = vsyncpa %s18, 0
    %20 = vsyncpa [#allocation7], 0
    %s21 = scalar_lea.sflag [#allocation7], 1
    %22 = vsyncpa %s21, 0
    %23 = vsyncpa [#allocation5], 0
    %s24 = scalar_lea.sflag [#allocation5], 1
    %25 = vsyncpa %s24, 0
    loop: start=0, step=1, limit=6
    $region2: #{tpu_custom_call.1} parent=1 // loop_pre_header
      _
    $region3: #{tpu_custom_call.1} parent=1 // loop_header
      %s27 = sphi 0, %s31
      %p28 = scmp.ge.s32.totalorder %s27, 6
      %s34 = sphi 0, %s46
      %s35 = sphi 0, %s42
      %s36 = sphi 0, %s34
      %s37 = sphi 0, %s35
      %s38 = sphi 0, %s36
      %s39 = sphi 0, %s37
      %s59 = sphi 0, %s61
      %s62 = sphi 0, %s59
      %s63 = sphi 0, %s62
      %s79 = sphi 0, %s63
      %s87 = sphi 0, %s89
      %s90 = sphi 0, %s87
      %s91 = sphi 0, %s90
      %s107 = sphi 0, %s91
      %s123 = sphi 0, %s125
      %s126 = sphi 0, %s123
      %s127 = sphi 0, %s126
      %s143 = sphi 0, %s127
      %s147 = sphi 0, %s147
      %s149 = sphi 0, %s147
      %s150 = sphi 0, %s149
      %s164 = sphi 0, %s150
      %s168 = sphi 0, %s168
      %s170 = sphi 0, %s168
      %s171 = sphi 0, %s170
      %s185 = sphi 0, %s171
      %s189 = sphi 0, %s189
      %s191 = sphi 0, %s189
      %s192 = sphi 0, %s191
      %s206 = sphi 0, %s192
      %s210 = sphi 0, %s210
      %s212 = sphi 0, %s210
      %s213 = sphi 0, %s212
      %s227 = sphi 0, %s213
      %s231 = sphi 0, %s231
      %s233 = sphi 0, %s231
      %s234 = sphi 0, %s233
      %s248 = sphi 0, %s234
      %s252 = sphi 0, %s252
      %s254 = sphi 0, %s252
      %s255 = sphi 0, %s254
      %s269 = sphi 0, %s255
      %s273 = sphi 0, %s273
      %s275 = sphi 0, %s273
      %s276 = sphi 0, %s275
      %s290 = sphi 0, %s276
      %s294 = sphi 0, %s294
      %s296 = sphi 0, %s294
      %s297 = sphi 0, %s296
      %s311 = sphi 0, %s297
      %s315 = sphi 0, %s315
      %s317 = sphi 0, %s315
      %s318 = sphi 0, %s317
      %s332 = sphi 0, %s318
      %s340 = sphi 0, %s342
      %s343 = sphi 0, %s340
      %s344 = sphi 0, %s343
      %s360 = sphi 0, %s344
    $region4: #{tpu_custom_call.1} parent=1 // loop_header_branch
      %30 = sbr.rel (%p28) target = $region8
    $region5: #{tpu_custom_call.1} parent=1 // loop_body
      %s32 = ssub.s32 %s27, 1
      %s33 = ssub.s32 %s27, 2
      %s40 = sadd.s32 1, %s35
      %p41 = scmp.ge.s32.totalorder %s40, 2
      %s42 = scalar_select %p41, 0, %s40
      %s43 = sadd.s32 1, %s34
      %s44 = scalar_select %p41, %s43, %s34
      %p45 = scmp.ge.s32.totalorder %s44, 2
      %s46 = scalar_select %p45, 0, %s44
      %s47 = smul.u32 %s35, 8
      %s48 = ssub.s32 %s47, 1
      %p49 = scmp.gt.s32.totalorder %s48, 0
      %s50 = scalar_select %p49, %s48, 0
      %s51 = smul.u32 %s42, 8
      %s52 = ssub.s32 %s51, 1
      %p53 = scmp.gt.s32.totalorder %s52, 0
      %s54 = scalar_select %p53, %s52, 0
      %s55 = ssub.s32 %s34, %s46
      %s56 = ssub.s32 %s50, %s54
      %s57 = sor.u32 %s55, %s56
      %p58 = scmp.eq.s32.totalorder %s57, 0
      %s60 = sadd.s32 %s59, 1
      %s61 = scalar_select %p58, %s59, %s60
      %p64 = pneg %p58
      %p65 = scmp.eq.s32.totalorder %s27, 3
      %p66 = por %p64, %p65
      %p67 = scmp.ne.s32.totalorder %s59, %s62
      %p68 = scmp.eq.s32.totalorder %s27, 0
      %p69 = por %p67, %p68
      %p70 = scmp.ne.s32.totalorder %s59, %s62
      %p71 = scmp.eq.s32.totalorder %s32, 3
      %p72 = por %p70, %p71
      %p73 = scmp.ne.s32.totalorder %s62, %s63
      %p74 = scmp.eq.s32.totalorder %s32, 0
      %p75 = por %p73, %p74
      %p76 = scmp.ne.s32.totalorder %s62, %s63
      %p77 = scmp.eq.s32.totalorder %s33, 3
      %p78 = por %p76, %p77
      %p80 = scmp.ne.s32.totalorder %s63, %s79
      %p81 = scmp.eq.s32.totalorder %s33, 0
      %p82 = por %p80, %p81
      %s83 = ssub.s32 %s34, %s46
      %s84 = ssub.s32 %s35, %s42
      %s85 = sor.u32 %s83, %s84
      %p86 = scmp.eq.s32.totalorder %s85, 0
      %s88 = sadd.s32 %s87, 1
      %s89 = scalar_select %p86, %s87, %s88
      %p92 = pneg %p86
      %p93 = scmp.eq.s32.totalorder %s27, 3
      %p94 = por %p92, %p93
      %p95 = scmp.ne.s32.totalorder %s87, %s90
      %p96 = scmp.eq.s32.totalorder %s27, 0
      %p97 = por %p95, %p96
      %p98 = scmp.ne.s32.totalorder %s87, %s90
      %p99 = scmp.eq.s32.totalorder %s32, 3
      %p100 = por %p98, %p99
      %p101 = scmp.ne.s32.totalorder %s90, %s91
      %p102 = scmp.eq.s32.totalorder %s32, 0
      %p103 = por %p101, %p102
      %p104 = scmp.ne.s32.totalorder %s90, %s91
      %p105 = scmp.eq.s32.totalorder %s33, 3
      %p106 = por %p104, %p105
      %p108 = scmp.ne.s32.totalorder %s91, %s107
      %p109 = scmp.eq.s32.totalorder %s33, 0
      %p110 = por %p108, %p109
      %s111 = sadd.s32 %s35, 1
      %s112 = smul.u32 %s111, 8
      %p113 = scmp.lt.s32.totalorder %s112, 15
      %s114 = scalar_select %p113, %s112, 15
      %s115 = sadd.s32 %s42, 1
      %s116 = smul.u32 %s115, 8
      %p117 = scmp.lt.s32.totalorder %s116, 15
      %s118 = scalar_select %p117, %s116, 15
      %s119 = ssub.s32 %s34, %s46
      %s120 = ssub.s32 %s114, %s118
      %s121 = sor.u32 %s119, %s120
      %p122 = scmp.eq.s32.totalorder %s121, 0
      %s124 = sadd.s32 %s123, 1
      %s125 = scalar_select %p122, %s123, %s124
      %p128 = pneg %p122
      %p129 = scmp.eq.s32.totalorder %s27, 3
      %p130 = por %p128, %p129
      %p131 = scmp.ne.s32.totalorder %s123, %s126
      %p132 = scmp.eq.s32.totalorder %s27, 0
      %p133 = por %p131, %p132
      %p134 = scmp.ne.s32.totalorder %s123, %s126
      %p135 = scmp.eq.s32.totalorder %s32, 3
      %p136 = por %p134, %p135
      %p137 = scmp.ne.s32.totalorder %s126, %s127
      %p138 = scmp.eq.s32.totalorder %s32, 0
      %p139 = por %p137, %p138
      %p140 = scmp.ne.s32.totalorder %s126, %s127
      %p141 = scmp.eq.s32.totalorder %s33, 3
      %p142 = por %p140, %p141
      %p144 = scmp.ne.s32.totalorder %s127, %s143
      %p145 = scmp.eq.s32.totalorder %s33, 0
      %p146 = por %p144, %p145
      %s148 = sadd.s32 %s147, 1
      %p151 = scmp.eq.s32.totalorder %s27, 3
      %p152 = scmp.ne.s32.totalorder %s147, %s149
      %p153 = scmp.eq.s32.totalorder %s27, 0
      %p154 = por %p152, %p153
      %p155 = scmp.ne.s32.totalorder %s147, %s149
      %p156 = scmp.eq.s32.totalorder %s32, 3
      %p157 = por %p155, %p156
      %p158 = scmp.ne.s32.totalorder %s149, %s150
      %p159 = scmp.eq.s32.totalorder %s32, 0
      %p160 = por %p158, %p159
      %p161 = scmp.ne.s32.totalorder %s149, %s150
      %p162 = scmp.eq.s32.totalorder %s33, 3
      %p163 = por %p161, %p162
      %p165 = scmp.ne.s32.totalorder %s150, %s164
      %p166 = scmp.eq.s32.totalorder %s33, 0
      %p167 = por %p165, %p166
      %s169 = sadd.s32 %s168, 1
      %p172 = scmp.eq.s32.totalorder %s27, 3
      %p173 = scmp.ne.s32.totalorder %s168, %s170
      %p174 = scmp.eq.s32.totalorder %s27, 0
      %p175 = por %p173, %p174
      %p176 = scmp.ne.s32.totalorder %s168, %s170
      %p177 = scmp.eq.s32.totalorder %s32, 3
      %p178 = por %p176, %p177
      %p179 = scmp.ne.s32.totalorder %s170, %s171
      %p180 = scmp.eq.s32.totalorder %s32, 0
      %p181 = por %p179, %p180
      %p182 = scmp.ne.s32.totalorder %s170, %s171
      %p183 = scmp.eq.s32.totalorder %s33, 3
      %p184 = por %p182, %p183
      %p186 = scmp.ne.s32.totalorder %s171, %s185
      %p187 = scmp.eq.s32.totalorder %s33, 0
      %p188 = por %p186, %p187
      %s190 = sadd.s32 %s189, 1
      %p193 = scmp.eq.s32.totalorder %s27, 3
      %p194 = scmp.ne.s32.totalorder %s189, %s191
      %p195 = scmp.eq.s32.totalorder %s27, 0
      %p196 = por %p194, %p195
      %p197 = scmp.ne.s32.totalorder %s189, %s191
      %p198 = scmp.eq.s32.totalorder %s32, 3
      %p199 = por %p197, %p198
      %p200 = scmp.ne.s32.totalorder %s191, %s192
      %p201 = scmp.eq.s32.totalorder %s32, 0
      %p202 = por %p200, %p201
      %p203 = scmp.ne.s32.totalorder %s191, %s192
      %p204 = scmp.eq.s32.totalorder %s33, 3
      %p205 = por %p203, %p204
      %p207 = scmp.ne.s32.totalorder %s192, %s206
      %p208 = scmp.eq.s32.totalorder %s33, 0
      %p209 = por %p207, %p208
      %s211 = sadd.s32 %s210, 1
      %p214 = scmp.eq.s32.totalorder %s27, 3
      %p215 = scmp.ne.s32.totalorder %s210, %s212
      %p216 = scmp.eq.s32.totalorder %s27, 0
      %p217 = por %p215, %p216
      %p218 = scmp.ne.s32.totalorder %s210, %s212
      %p219 = scmp.eq.s32.totalorder %s32, 3
      %p220 = por %p218, %p219
      %p221 = scmp.ne.s32.totalorder %s212, %s213
      %p222 = scmp.eq.s32.totalorder %s32, 0
      %p223 = por %p221, %p222
      %p224 = scmp.ne.s32.totalorder %s212, %s213
      %p225 = scmp.eq.s32.totalorder %s33, 3
      %p226 = por %p224, %p225
      %p228 = scmp.ne.s32.totalorder %s213, %s227
      %p229 = scmp.eq.s32.totalorder %s33, 0
      %p230 = por %p228, %p229
      %s232 = sadd.s32 %s231, 1
      %p235 = scmp.eq.s32.totalorder %s27, 3
      %p236 = scmp.ne.s32.totalorder %s231, %s233
      %p237 = scmp.eq.s32.totalorder %s27, 0
      %p238 = por %p236, %p237
      %p239 = scmp.ne.s32.totalorder %s231, %s233
      %p240 = scmp.eq.s32.totalorder %s32, 3
      %p241 = por %p239, %p240
      %p242 = scmp.ne.s32.totalorder %s233, %s234
      %p243 = scmp.eq.s32.totalorder %s32, 0
      %p244 = por %p242, %p243
      %p245 = scmp.ne.s32.totalorder %s233, %s234
      %p246 = scmp.eq.s32.totalorder %s33, 3
      %p247 = por %p245, %p246
      %p249 = scmp.ne.s32.totalorder %s234, %s248
      %p250 = scmp.eq.s32.totalorder %s33, 0
      %p251 = por %p249, %p250
      %s253 = sadd.s32 %s252, 1
      %p256 = scmp.eq.s32.totalorder %s27, 3
      %p257 = scmp.ne.s32.totalorder %s252, %s254
      %p258 = scmp.eq.s32.totalorder %s27, 0
      %p259 = por %p257, %p258
      %p260 = scmp.ne.s32.totalorder %s252, %s254
      %p261 = scmp.eq.s32.totalorder %s32, 3
      %p262 = por %p260, %p261
      %p263 = scmp.ne.s32.totalorder %s254, %s255
      %p264 = scmp.eq.s32.totalorder %s32, 0
      %p265 = por %p263, %p264
      %p266 = scmp.ne.s32.totalorder %s254, %s255
      %p267 = scmp.eq.s32.totalorder %s33, 3
      %p268 = por %p266, %p267
      %p270 = scmp.ne.s32.totalorder %s255, %s269
      %p271 = scmp.eq.s32.totalorder %s33, 0
      %p272 = por %p270, %p271
      %s274 = sadd.s32 %s273, 1
      %p277 = scmp.eq.s32.totalorder %s27, 3
      %p278 = scmp.ne.s32.totalorder %s273, %s275
      %p279 = scmp.eq.s32.totalorder %s27, 0
      %p280 = por %p278, %p279
      %p281 = scmp.ne.s32.totalorder %s273, %s275
      %p282 = scmp.eq.s32.totalorder %s32, 3
      %p283 = por %p281, %p282
      %p284 = scmp.ne.s32.totalorder %s275, %s276
      %p285 = scmp.eq.s32.totalorder %s32, 0
      %p286 = por %p284, %p285
      %p287 = scmp.ne.s32.totalorder %s275, %s276
      %p288 = scmp.eq.s32.totalorder %s33, 3
      %p289 = por %p287, %p288
      %p291 = scmp.ne.s32.totalorder %s276, %s290
      %p292 = scmp.eq.s32.totalorder %s33, 0
      %p293 = por %p291, %p292
      %s295 = sadd.s32 %s294, 1
      %p298 = scmp.eq.s32.totalorder %s27, 3
      %p299 = scmp.ne.s32.totalorder %s294, %s296
      %p300 = scmp.eq.s32.totalorder %s27, 0
      %p301 = por %p299, %p300
      %p302 = scmp.ne.s32.totalorder %s294, %s296
      %p303 = scmp.eq.s32.totalorder %s32, 3
      %p304 = por %p302, %p303
      %p305 = scmp.ne.s32.totalorder %s296, %s297
      %p306 = scmp.eq.s32.totalorder %s32, 0
      %p307 = por %p305, %p306
      %p308 = scmp.ne.s32.totalorder %s296, %s297
      %p309 = scmp.eq.s32.totalorder %s33, 3
      %p310 = por %p308, %p309
      %p312 = scmp.ne.s32.totalorder %s297, %s311
      %p313 = scmp.eq.s32.totalorder %s33, 0
      %p314 = por %p312, %p313
      %s316 = sadd.s32 %s315, 1
      %p319 = scmp.eq.s32.totalorder %s27, 3
      %p320 = scmp.ne.s32.totalorder %s315, %s317
      %p321 = scmp.eq.s32.totalorder %s27, 0
      %p322 = por %p320, %p321
      %p323 = scmp.ne.s32.totalorder %s315, %s317
      %p324 = scmp.eq.s32.totalorder %s32, 3
      %p325 = por %p323, %p324
      %p326 = scmp.ne.s32.totalorder %s317, %s318
      %p327 = scmp.eq.s32.totalorder %s32, 0
      %p328 = por %p326, %p327
      %p329 = scmp.ne.s32.totalorder %s317, %s318
      %p330 = scmp.eq.s32.totalorder %s33, 3
      %p331 = por %p329, %p330
      %p333 = scmp.ne.s32.totalorder %s318, %s332
      %p334 = scmp.eq.s32.totalorder %s33, 0
      %p335 = por %p333, %p334
      %s336 = ssub.s32 %s34, %s46
      %s337 = ssub.s32 %s35, %s42
      %s338 = sor.u32 %s336, %s337
      %p339 = scmp.eq.s32.totalorder %s338, 0
      %s341 = sadd.s32 %s340, 1
      %s342 = scalar_select %p339, %s340, %s341
      %p345 = pneg %p339
      %p346 = scmp.eq.s32.totalorder %s27, 3
      %p347 = por %p345, %p346
      %p348 = scmp.ne.s32.totalorder %s340, %s343
      %p349 = scmp.eq.s32.totalorder %s27, 0
      %p350 = por %p348, %p349
      %p351 = scmp.ne.s32.totalorder %s340, %s343
      %p352 = scmp.eq.s32.totalorder %s32, 3
      %p353 = por %p351, %p352
      %p354 = scmp.ne.s32.totalorder %s343, %s344
      %p355 = scmp.eq.s32.totalorder %s32, 0
      %p356 = por %p354, %p355
      %p357 = scmp.ne.s32.totalorder %s343, %s344
      %p358 = scmp.eq.s32.totalorder %s33, 3
      %p359 = por %p357, %p358
      %p361 = scmp.ne.s32.totalorder %s344, %s360
      %p362 = scmp.eq.s32.totalorder %s33, 0
      %p363 = por %p361, %p362
      %p364 = scmp.le.s32.totalorder 1, %s27
      %p365 = scmp.lt.s32.totalorder %s27, 5
      %p366 = pnand %p364, %p365
      %p367 = pneg %p366
      // Predicated region
      $region9: #{tpu_custom_call.1} parent=5 // pred_check
        _
      $region10: #{tpu_custom_call.1} parent=5 // pred_check_branch
        %369 = sbr.rel (%p366) target = $region12
      $region11: #{tpu_custom_call.1} parent=5 // pred_region
        %s370 = ssub.s32 %s27, 1
        // Predicated region
        $region13: #{tpu_custom_call.1} parent=11 // pred_check
          %p371 = pneg %p160
        $region14: #{tpu_custom_call.1} parent=11 // pred_check_branch
          %373 = sbr.rel (%p371) target = $region16
        $region15: #{tpu_custom_call.1} parent=11 // pred_region
          _
        $region16: #{tpu_custom_call.1} parent=11 // pred_fallthru
          _
        // Predicated region
        $region17: #{tpu_custom_call.1} parent=11 // pred_check
          %p374 = pneg %p181
        $region18: #{tpu_custom_call.1} parent=11 // pred_check_branch
          %376 = sbr.rel (%p374) target = $region20
        $region19: #{tpu_custom_call.1} parent=11 // pred_region
          _
        $region20: #{tpu_custom_call.1} parent=11 // pred_fallthru
          _
        // Predicated region
        $region21: #{tpu_custom_call.1} parent=11 // pred_check
          %p377 = pneg %p202
        $region22: #{tpu_custom_call.1} parent=11 // pred_check_branch
          %379 = sbr.rel (%p377) target = $region24
        $region23: #{tpu_custom_call.1} parent=11 // pred_region
          _
        $region24: #{tpu_custom_call.1} parent=11 // pred_fallthru
          _
        // Predicated region
        $region25: #{tpu_custom_call.1} parent=11 // pred_check
          %p380 = pneg %p223
        $region26: #{tpu_custom_call.1} parent=11 // pred_check_branch
          %382 = sbr.rel (%p380) target = $region28
        $region27: #{tpu_custom_call.1} parent=11 // pred_region
          _
        $region28: #{tpu_custom_call.1} parent=11 // pred_fallthru
          _
        // Predicated region
        $region29: #{tpu_custom_call.1} parent=11 // pred_check
          %p383 = pneg %p244
        $region30: #{tpu_custom_call.1} parent=11 // pred_check_branch
          %385 = sbr.rel (%p383) target = $region32
        $region31: #{tpu_custom_call.1} parent=11 // pred_region
          _
        $region32: #{tpu_custom_call.1} parent=11 // pred_fallthru
          _
        // Predicated region
        $region33: #{tpu_custom_call.1} parent=11 // pred_check
          %p386 = pneg %p265
        $region34: #{tpu_custom_call.1} parent=11 // pred_check_branch
          %388 = sbr.rel (%p386) target = $region36
        $region35: #{tpu_custom_call.1} parent=11 // pred_region
          _
        $region36: #{tpu_custom_call.1} parent=11 // pred_fallthru
          _
        // Predicated region
        $region37: #{tpu_custom_call.1} parent=11 // pred_check
          %p389 = pneg %p286
        $region38: #{tpu_custom_call.1} parent=11 // pred_check_branch
          %391 = sbr.rel (%p389) target = $region40
        $region39: #{tpu_custom_call.1} parent=11 // pred_region
          _
        $region40: #{tpu_custom_call.1} parent=11 // pred_fallthru
          _
        // Predicated region
        $region41: #{tpu_custom_call.1} parent=11 // pred_check
          %p392 = pneg %p307
        $region42: #{tpu_custom_call.1} parent=11 // pred_check_branch
          %394 = sbr.rel (%p392) target = $region44
        $region43: #{tpu_custom_call.1} parent=11 // pred_region
          _
        $region44: #{tpu_custom_call.1} parent=11 // pred_fallthru
          _
        // Predicated region
        $region45: #{tpu_custom_call.1} parent=11 // pred_check
          %p395 = pneg %p328
        $region46: #{tpu_custom_call.1} parent=11 // pred_check_branch
          %397 = sbr.rel (%p395) target = $region48
        $region47: #{tpu_custom_call.1} parent=11 // pred_region
          _
        $region48: #{tpu_custom_call.1} parent=11 // pred_fallthru
          _
      $region12: #{tpu_custom_call.1} parent=5 // pred_fallthru
        _
      %p398 = scmp.lt.s32.totalorder %s27, 4
      // Predicated region
      $region49: #{tpu_custom_call.1} parent=5 // pred_check
        %p399 = pneg %p398
      $region50: #{tpu_custom_call.1} parent=5 // pred_check_branch
        %401 = sbr.rel (%p399) target = $region52
      $region51: #{tpu_custom_call.1} parent=5 // pred_region
        // Predicated region
        $region53: #{tpu_custom_call.1} parent=51 // pred_check
          %p402 = pneg %p69
        $region54: #{tpu_custom_call.1} parent=51 // pred_check_branch
          %404 = sbr.rel (%p402) target = $region56
        $region55: #{tpu_custom_call.1} parent=51 // pred_region
          %s405 = sand.u32 %s59, 1
          %s406 = scalar_lea.sflag [#allocation4], %s405
          %s407 = sand.u32 %s59, 1
          %s408 = smul.addr %s407, 8
          %s409 = scalar_lea.vmem [#allocation3], %s408
          %s410 = smul.u32 %s35, 8
          %s411 = ssub.s32 %s410, 1
          %p412 = scmp.gt.s32.totalorder %s411, 0
          %s413 = scalar_select %p412, %s411, 0
          %s415 = ssub.s32 128, 128
          %416 = vsyncadd %s406, %s415
          %s417 = smul.addr %s413, 2
          %s418 = smul.addr %s34, 32
          %s419 = sadd.s32 %s417, %s418
          %s420 = smul.addr %s419, 64
          %s421 = scalar_lea.hbm %s0, %s420
          %s422 = sshll.u32 %s409, 4
          %s423 = int_to_ptr.vmem [resolvable:$true] %s422
          %428 = dma.hbm_to_vmem [thread:$0]  %s421, 128, %s423, %s406, 64, 64, 4
        $region56: #{tpu_custom_call.1} parent=51 // pred_fallthru
          _
        // Predicated region
        $region57: #{tpu_custom_call.1} parent=51 // pred_check
          %p429 = pneg %p97
        $region58: #{tpu_custom_call.1} parent=51 // pred_check_branch
          %431 = sbr.rel (%p429) target = $region60
        $region59: #{tpu_custom_call.1} parent=51 // pred_region
          %s432 = sand.u32 %s27, 1
          %s433 = scalar_lea.sflag [#allocation7], %s432
          %s434 = sand.u32 %s87, 1
          %s435 = smul.addr %s434, 64
          %s436 = scalar_lea.vmem [#allocation6], %s435
          %s437 = smul.u32 8, %s35
          %s439 = ssub.s32 1024, 1024
          %440 = vsyncadd %s433, %s439
          %s441 = smul.addr %s437, 2
          %s442 = smul.addr %s34, 32
          %s443 = sadd.s32 %s441, %s442
          %s444 = smul.addr %s443, 64
          %s445 = scalar_lea.hbm %s1, %s444
          %s446 = sshll.u32 %s436, 4
          %s447 = int_to_ptr.vmem [resolvable:$true] %s446
          %452 = dma.hbm_to_vmem [thread:$0]  %s445, 1024, %s447, %s433, 64, 64, 4
        $region60: #{tpu_custom_call.1} parent=51 // pred_fallthru
          _
        // Predicated region
        $region61: #{tpu_custom_call.1} parent=51 // pred_check
          %p453 = pneg %p133
        $region62: #{tpu_custom_call.1} parent=51 // pred_check_branch
          %455 = sbr.rel (%p453) target = $region64
        $region63: #{tpu_custom_call.1} parent=51 // pred_region
          %s456 = sand.u32 %s27, 1
          %s457 = scalar_lea.sflag [#allocation7], %s456
          %s458 = sand.u32 %s123, 1
          %s459 = smul.addr %s458, 8
          %s460 = scalar_lea.vmem [#allocation8], %s459
          %s461 = sadd.s32 %s35, 1
          %s462 = smul.u32 %s461, 8
          %p463 = scmp.lt.s32.totalorder %s462, 15
          %s464 = scalar_select %p463, %s462, 15
          %s466 = ssub.s32 128, 128
          %467 = vsyncadd %s457, %s466
          %s468 = smul.addr %s464, 2
          %s469 = smul.addr %s34, 32
          %s470 = sadd.s32 %s468, %s469
          %s471 = smul.addr %s470, 64
          %s472 = scalar_lea.hbm %s2, %s471
          %s473 = sshll.u32 %s460, 4
          %s474 = int_to_ptr.vmem [resolvable:$true] %s473
          %479 = dma.hbm_to_vmem [thread:$0]  %s472, 128, %s474, %s457, 64, 64, 4
        $region64: #{tpu_custom_call.1} parent=51 // pred_fallthru
          _
      $region52: #{tpu_custom_call.1} parent=5 // pred_fallthru
        _
      %p480 = scmp.le.s32.totalorder 1, %s27
      %p481 = scmp.lt.s32.totalorder %s27, 5
      %p482 = pnand %p480, %p481
      %p483 = pneg %p482
      // Predicated region
      $region65: #{tpu_custom_call.1} parent=5 // pred_check
        _
      $region66: #{tpu_custom_call.1} parent=5 // pred_check_branch
        %485 = sbr.rel (%p482) target = $region68
      $region67: #{tpu_custom_call.1} parent=5 // pred_region
        %s486 = ssub.s32 %s27, 1
        %s487 = sand.u32 %s62, 1
        %s488 = scalar_lea.sflag [#allocation4], %s487
        %s489 = sand.u32 %s62, 1
        %s490 = smul.addr %s489, 8
        %s491 = scalar_lea.vmem [#allocation3], %s490
        // Predicated region
        $region69: #{tpu_custom_call.1} parent=67 // pred_check
          %p492 = pneg %p75
        $region70: #{tpu_custom_call.1} parent=67 // pred_check_branch
          %494 = sbr.rel (%p492) target = $region72
        $region71: #{tpu_custom_call.1} parent=67 // pred_region
          %495 = dma.done %s488, 128
        $region72: #{tpu_custom_call.1} parent=67 // pred_fallthru
          _
        %s496 = sand.u32 %s32, 1
        %s497 = scalar_lea.sflag [#allocation7], %s496
        %s498 = sand.u32 %s90, 1
        %s499 = smul.addr %s498, 64
        %s500 = scalar_lea.vmem [#allocation6], %s499
        // Predicated region
        $region73: #{tpu_custom_call.1} parent=67 // pred_check
          %p501 = pneg %p103
        $region74: #{tpu_custom_call.1} parent=67 // pred_check_branch
          %503 = sbr.rel (%p501) target = $region76
        $region75: #{tpu_custom_call.1} parent=67 // pred_region
          %504 = dma.done %s497, 1024
        $region76: #{tpu_custom_call.1} parent=67 // pred_fallthru
          _
        %s505 = sand.u32 %s32, 1
        %s506 = scalar_lea.sflag [#allocation7], %s505
        %s507 = sand.u32 %s126, 1
        %s508 = smul.addr %s507, 8
        %s509 = scalar_lea.vmem [#allocation8], %s508
        // Predicated region
        $region77: #{tpu_custom_call.1} parent=67 // pred_check
          %p510 = pneg %p139
        $region78: #{tpu_custom_call.1} parent=67 // pred_check_branch
          %512 = sbr.rel (%p510) target = $region80
        $region79: #{tpu_custom_call.1} parent=67 // pred_region
          %513 = dma.done %s506, 128
        $region80: #{tpu_custom_call.1} parent=67 // pred_fallthru
          _
        %s514 = sand.u32 %s62, 1
        %s515 = scalar_lea.sflag [#allocation4], %s514
        %s516 = sand.u32 %s62, 1
        %s517 = smul.addr %s516, 8
        %s518 = scalar_lea.vmem [#allocation3], %s517
        %p519 = pneg %p75
        %p520 = pneg %p72
        %s521 = sand.u32 %s32, 1
        %s522 = scalar_lea.sflag [#allocation7], %s521
        %s523 = sand.u32 %s90, 1
        %s524 = smul.addr %s523, 64
        %s525 = scalar_lea.vmem [#allocation6], %s524
        %p526 = pneg %p103
        %p527 = pneg %p100
        %s528 = sand.u32 %s32, 1
        %s529 = scalar_lea.sflag [#allocation7], %s528
        %s530 = sand.u32 %s126, 1
        %s531 = smul.addr %s530, 8
        %s532 = scalar_lea.vmem [#allocation8], %s531
        %p533 = pneg %p139
        %p534 = pneg %p136
        %p535 = pneg %p160
        %p536 = pneg %p157
        %p537 = pneg %p181
        %p538 = pneg %p178
        %p539 = pneg %p202
        %p540 = pneg %p199
        %p541 = pneg %p223
        %p542 = pneg %p220
        %p543 = pneg %p244
        %p544 = pneg %p241
        %p545 = pneg %p265
        %p546 = pneg %p262
        %p547 = pneg %p286
        %p548 = pneg %p283
        %p549 = pneg %p307
        %p550 = pneg %p304
        %p551 = pneg %p328
        %p552 = pneg %p325
        %p553 = pneg %p356
        %p554 = pneg %p353
        %s555 = sand.u32 %s343, 1
        %s556 = scalar_lea.sflag [#allocation5], %s555
        %s557 = sand.u32 %s343, 1
        %s558 = smul.addr %s557, 64
        %s559 = scalar_lea.vmem [#allocation9], %s558
        %s560 = smul.u32 %s37, 8
        %s561 = ssub.s32 %s560, 1
        %p562 = scmp.gt.s32.totalorder %s561, 0
        %s563 = scalar_select %p562, %s561, 0
        %s564 = smul.u32 8, %s37
        %s565 = sadd.s32 %s37, 1
        %s566 = smul.u32 %s565, 8
        %p567 = scmp.lt.s32.totalorder %s566, 15
        %s568 = scalar_select %p567, %s566, 15
        %s569 = smul.u32 8, %s37
        %v571 = vld [vmem:[%s500] sm:$0xf]
        %v572 = vld [vmem:[%s500 + $0x4] sm:$0xf]
        %v573 = vld [vmem:[%s500 + $0x8] sm:$0xf]
        %v574 = vld [vmem:[%s500 + $0xc] sm:$0xf]
        %v575 = vld [vmem:[%s500 + $0x10] sm:$0xf]
        %v576 = vld [vmem:[%s500 + $0x14] sm:$0xf]
        %v577 = vld [vmem:[%s500 + $0x18] sm:$0xf]
        %v578 = vld [vmem:[%s500 + $0x1c] sm:$0xf]
        %v579 = vld [vmem:[%s500 + $0x20] sm:$0xf]
        %v580 = vld [vmem:[%s500 + $0x24] sm:$0xf]
        %v581 = vld [vmem:[%s500 + $0x28] sm:$0xf]
        %v582 = vld [vmem:[%s500 + $0x2c] sm:$0xf]
        %v583 = vld [vmem:[%s500 + $0x30] sm:$0xf]
        %v584 = vld [vmem:[%s500 + $0x34] sm:$0xf]
        %v585 = vld [vmem:[%s500 + $0x38] sm:$0xf]
        %v586 = vld [vmem:[%s500 + $0x3c] sm:$0xf]
        %v587 = vld [vmem:[%s3] sm:$0xf]
        %v588 = vld [vmem:[%s3 + $0x4] sm:$0xf]
        %v605 = vunpack.c.l.b16 %v571
        %v606 = vunpack.c.l.b16 %v572
        %v607 = vunpack.c.l.b16 %v573
        %v608 = vunpack.c.l.b16 %v574
        %v609 = vunpack.c.l.b16 %v575
        %v610 = vunpack.c.l.b16 %v576
        %v611 = vunpack.c.l.b16 %v577
        %v612 = vunpack.c.l.b16 %v578
        %v613 = vunpack.c.l.b16 %v579
        %v614 = vunpack.c.l.b16 %v580
        %v615 = vunpack.c.l.b16 %v581
        %v616 = vunpack.c.l.b16 %v582
        %v617 = vunpack.c.l.b16 %v583
        %v618 = vunpack.c.l.b16 %v584
        %v619 = vunpack.c.l.b16 %v585
        %v620 = vunpack.c.l.b16 %v586
        %v621 = vpack.c.b16 %v606, %v605
        %v622 = vpack.c.b16 %v608, %v607
        %v623 = vpack.c.b16 %v610, %v609
        %v624 = vpack.c.b16 %v612, %v611
        %v625 = vpack.c.b16 %v614, %v613
        %v626 = vpack.c.b16 %v616, %v615
        %v627 = vpack.c.b16 %v618, %v617
        %v628 = vpack.c.b16 %v620, %v619
        %v631 = vunpack.c.l.b16 %v587
        %v632 = vunpack.c.l.b16 %v588
        %v633 = vpack.c.b16 %v632, %v631
        %vm635 = vcmask 130048
        %v637 = vsel %vm635, %v621, 0
        %v640 = vsel %vm635, %v622, 0
        %v643 = vsel %vm635, %v623, 0
        %v646 = vsel %vm635, %v624, 0
        %v649 = vsel %vm635, %v625, 0
        %v652 = vsel %vm635, %v626, 0
        %v655 = vsel %vm635, %v627, 0
        %v658 = vsel %vm635, %v628, 0
        %660 = vmatprep.subr.bf16.mxu0 0
        %661 = vmatpush1.bf16.msra.mxu0 0
        %662 = vmatprep.subr.bf16.mxu0 0
        %663 = vmatpush1.bf16.msra.mxu0 0
        %664 = vmatprep.subr.bf16.mxu0 0
        %665 = vmatpush1.bf16.msra.mxu0 0
        %666 = vmatprep.subr.bf16.mxu0 0
        %667 = vmatpush1.bf16.msra.mxu0 0
        %668 = vmatprep.subr.bf16.mxu0 0
        %669 = vmatpush1.bf16.msra.mxu0 0
        %670 = vmatprep.subr.bf16.mxu0 0
        %671 = vmatpush1.bf16.msra.mxu0 0
        %672 = vmatprep.subr.bf16.mxu0 0
        %673 = vmatpush1.bf16.msra.mxu0 0
        %674 = vmatprep.subr.bf16.mxu0 0
        %675 = vmatpush1.bf16.msra.mxu0 %v633
        %676 = vmatprep.subr.bf16.mxu0 0
        %677 = vmatpush2.bf16.msra.mxu0 0
        %678 = vmatprep.subr.bf16.mxu0 0
        %679 = vmatpush2.bf16.msra.mxu0 0
        %680 = vmatprep.subr.bf16.mxu0 0
        %681 = vmatpush2.bf16.msra.mxu0 0
        %682 = vmatprep.subr.bf16.mxu0 0
        %683 = vmatpush2.bf16.msra.mxu0 0
        %684 = vmatprep.subr.bf16.mxu0 0
        %685 = vmatpush2.bf16.msra.mxu0 0
        %686 = vmatprep.subr.bf16.mxu0 0
        %687 = vmatpush2.bf16.msra.mxu0 0
        %688 = vmatprep.subr.bf16.mxu0 0
        %689 = vmatpush2.bf16.msra.mxu0 0
        %690 = vmatprep.subr.bf16.mxu0 0
        %691 = vmatpush2.bf16.msra.mxu0 0
        %692 = vmatprep.mubr.bf16.mxu0 0
        %693 = vmatmul.mubr.bf16.gmra.mxu0 %v637
        %v694 = vpop.f32.mrf.mxu0
        %v695 = vadd.f32 0.0, %v694
        %v696 = vpop.f32.mrf.mxu0
        %v697 = vpop.f32.mrf.mxu0
        %v698 = vadd.f32 0.0, %v697
        %v699 = vpop.f32.mrf.mxu0
        %700 = vmatprep.mubr.bf16.mxu0 0
        %701 = vmatmul.mubr.bf16.gmra.mxu0 %v640
        %v702 = vpop.f32.mrf.mxu0
        %v703 = vadd.f32 0.0, %v702
        %v704 = vpop.f32.mrf.mxu0
        %v705 = vpop.f32.mrf.mxu0
        %v706 = vadd.f32 0.0, %v705
        %v707 = vpop.f32.mrf.mxu0
        %708 = vmatprep.mubr.bf16.mxu0 0
        %709 = vmatmul.mubr.bf16.gmra.mxu0 %v643
        %v710 = vpop.f32.mrf.mxu0
        %v711 = vadd.f32 0.0, %v710
        %v712 = vpop.f32.mrf.mxu0
        %v713 = vpop.f32.mrf.mxu0
        %v714 = vadd.f32 0.0, %v713
        %v715 = vpop.f32.mrf.mxu0
        %716 = vmatprep.mubr.bf16.mxu0 0
        %717 = vmatmul.mubr.bf16.gmra.mxu0 %v646
        %v718 = vpop.f32.mrf.mxu0
        %v719 = vadd.f32 0.0, %v718
        %v720 = vpop.f32.mrf.mxu0
        %v721 = vpop.f32.mrf.mxu0
        %v722 = vadd.f32 0.0, %v721
        %v723 = vpop.f32.mrf.mxu0
        %724 = vmatprep.mubr.bf16.mxu0 0
        %725 = vmatmul.mubr.bf16.gmra.mxu0 %v649
        %v726 = vpop.f32.mrf.mxu0
        %v727 = vadd.f32 0.0, %v726
        %v728 = vpop.f32.mrf.mxu0
        %v729 = vpop.f32.mrf.mxu0
        %v730 = vadd.f32 0.0, %v729
        %v731 = vpop.f32.mrf.mxu0
        %732 = vmatprep.mubr.bf16.mxu0 0
        %733 = vmatmul.mubr.bf16.gmra.mxu0 %v652
        %v734 = vpop.f32.mrf.mxu0
        %v735 = vadd.f32 0.0, %v734
        %v736 = vpop.f32.mrf.mxu0
        %v737 = vpop.f32.mrf.mxu0
        %v738 = vadd.f32 0.0, %v737
        %v739 = vpop.f32.mrf.mxu0
        %740 = vmatprep.mubr.bf16.mxu0 0
        %741 = vmatmul.mubr.bf16.gmra.mxu0 %v655
        %v742 = vpop.f32.mrf.mxu0
        %v743 = vadd.f32 0.0, %v742
        %v744 = vpop.f32.mrf.mxu0
        %v745 = vpop.f32.mrf.mxu0
        %v746 = vadd.f32 0.0, %v745
        %v747 = vpop.f32.mrf.mxu0
        %748 = vmatprep.mubr.bf16.mxu0 0
        %749 = vmatmul.mubr.bf16.gmra.mxu0 %v658
        %v750 = vpop.f32.mrf.mxu0
        %v751 = vadd.f32 0.0, %v750
        %v752 = vpop.f32.mrf.mxu0
        %v753 = vpop.f32.mrf.mxu0
        %v754 = vadd.f32 0.0, %v753
        %v755 = vpop.f32.mrf.mxu0
        %756 = vdwg.mxu0
        %v757 = vld [vmem:[%s6] sm:$0x1]
        %v759 = vlaneseq
        %v760 = vshrl.u32 %v759, 7
        %v761 = vsub.s32 0, %v760
        %v762 = vrot.slane %v757, %v761
        %v764 = vmul.f32 %v695, %v762
        %v765 = vmul.f32 %v698, %v762
        %v766 = vmul.f32 %v703, %v762
        %v767 = vmul.f32 %v706, %v762
        %v768 = vmul.f32 %v711, %v762
        %v769 = vmul.f32 %v714, %v762
        %v770 = vmul.f32 %v719, %v762
        %v771 = vmul.f32 %v722, %v762
        %v772 = vmul.f32 %v727, %v762
        %v773 = vmul.f32 %v730, %v762
        %v774 = vmul.f32 %v735, %v762
        %v775 = vmul.f32 %v738, %v762
        %v776 = vmul.f32 %v743, %v762
        %v777 = vmul.f32 %v746, %v762
        %v778 = vmul.f32 %v751, %v762
        %v779 = vmul.f32 %v754, %v762
        %v780 = vld [vmem:[%s7] sm:$0x1]
        %v782 = vlaneseq
        %v783 = vshrl.u32 %v782, 7
        %v784 = vsub.s32 0, %v783
        %v785 = vrot.slane %v780, %v784
        %v787 = vadd.f32 %v764, %v785
        %v788 = vadd.f32 %v765, %v785
        %v789 = vadd.f32 %v766, %v785
        %v790 = vadd.f32 %v767, %v785
        %v791 = vadd.f32 %v768, %v785
        %v792 = vadd.f32 %v769, %v785
        %v793 = vadd.f32 %v770, %v785
        %v794 = vadd.f32 %v771, %v785
        %v795 = vadd.f32 %v772, %v785
        %v796 = vadd.f32 %v773, %v785
        %v797 = vadd.f32 %v774, %v785
        %v798 = vadd.f32 %v775, %v785
        %v799 = vadd.f32 %v776, %v785
        %v800 = vadd.f32 %v777, %v785
        %v801 = vadd.f32 %v778, %v785
        %v802 = vadd.f32 %v779, %v785
        %v803 = vmax.f32 %v787, 0.0
        %v804 = vmax.f32 %v788, 0.0
        %v805 = vmax.f32 %v789, 0.0
        %v806 = vmax.f32 %v790, 0.0
        %v807 = vmax.f32 %v791, 0.0
        %v808 = vmax.f32 %v792, 0.0
        %v809 = vmax.f32 %v793, 0.0
        %v810 = vmax.f32 %v794, 0.0
        %v811 = vmax.f32 %v795, 0.0
        %v812 = vmax.f32 %v796, 0.0
        %v813 = vmax.f32 %v797, 0.0
        %v814 = vmax.f32 %v798, 0.0
        %v815 = vmax.f32 %v799, 0.0
        %v816 = vmax.f32 %v800, 0.0
        %v817 = vmax.f32 %v801, 0.0
        %v818 = vmax.f32 %v802, 0.0
        %v819 = vlaneseq
        %v820 = vshrl.u32 %v819, 7
        %v821 = vadd.s32 %v820, 8
        %v822 = vadd.s32 %v820, 16
        %v823 = vadd.s32 %v820, 24
        %v824 = vadd.s32 %v820, 32
        %v825 = vadd.s32 %v820, 40
        %v826 = vadd.s32 %v820, 48
        %v827 = vadd.s32 %v820, 56
        %v828 = vadd.s32 %v820, 64
        %v829 = vadd.s32 %v820, 72
        %v830 = vadd.s32 %v820, 80
        %v831 = vadd.s32 %v820, 88
        %v832 = vadd.s32 %v820, 96
        %v833 = vadd.s32 %v820, 104
        %v834 = vadd.s32 %v820, 112
        %v835 = vadd.s32 %v820, 120
        %vm836 = vcmp.lt.s32.totalorder %v820, 0
        %v837 = vsub.s32 0, %v820
        %v838 = vsel %vm836, %v837, %v820
        %v839 = vshrl.u32 %v838, 4
        %v840 = vand.u32 %v838, 15
        %v841 = vsub.s32 0, %v840
        %v842 = vsel %vm836, %v841, %v840
        %vm843 = vcmp.lt.s32.totalorder %v821, 0
        %v844 = vsub.s32 0, %v821
        %v845 = vsel %vm843, %v844, %v821
        %v846 = vshrl.u32 %v845, 4
        %v847 = vand.u32 %v845, 15
        %v848 = vsub.s32 0, %v847
        %v849 = vsel %vm843, %v848, %v847
        %vm850 = vcmp.lt.s32.totalorder %v822, 0
        %v851 = vsub.s32 0, %v822
        %v852 = vsel %vm850, %v851, %v822
        %v853 = vshrl.u32 %v852, 4
        %v854 = vand.u32 %v852, 15
        %v855 = vsub.s32 0, %v854
        %v856 = vsel %vm850, %v855, %v854
        %vm857 = vcmp.lt.s32.totalorder %v823, 0
        %v858 = vsub.s32 0, %v823
        %v859 = vsel %vm857, %v858, %v823
        %v860 = vshrl.u32 %v859, 4
        %v861 = vand.u32 %v859, 15
        %v862 = vsub.s32 0, %v861
        %v863 = vsel %vm857, %v862, %v861
        %vm864 = vcmp.lt.s32.totalorder %v824, 0
        %v865 = vsub.s32 0, %v824
        %v866 = vsel %vm864, %v865, %v824
        %v867 = vshrl.u32 %v866, 4
        %v868 = vand.u32 %v866, 15
        %v869 = vsub.s32 0, %v868
        %v870 = vsel %vm864, %v869, %v868
        %vm871 = vcmp.lt.s32.totalorder %v825, 0
        %v872 = vsub.s32 0, %v825
        %v873 = vsel %vm871, %v872, %v825
        %v874 = vshrl.u32 %v873, 4
        %v875 = vand.u32 %v873, 15
        %v876 = vsub.s32 0, %v875
        %v877 = vsel %vm871, %v876, %v875
        %vm878 = vcmp.lt.s32.totalorder %v826, 0
        %v879 = vsub.s32 0, %v826
        %v880 = vsel %vm878, %v879, %v826
        %v881 = vshrl.u32 %v880, 4
        %v882 = vand.u32 %v880, 15
        %v883 = vsub.s32 0, %v882
        %v884 = vsel %vm878, %v883, %v882
        %vm885 = vcmp.lt.s32.totalorder %v827, 0
        %v886 = vsub.s32 0, %v827
        %v887 = vsel %vm885, %v886, %v827
        %v888 = vshrl.u32 %v887, 4
        %v889 = vand.u32 %v887, 15
        %v890 = vsub.s32 0, %v889
        %v891 = vsel %vm885, %v890, %v889
        %vm892 = vcmp.lt.s32.totalorder %v828, 0
        %v893 = vsub.s32 0, %v828
        %v894 = vsel %vm892, %v893, %v828
        %v895 = vshrl.u32 %v894, 4
        %v896 = vand.u32 %v894, 15
        %v897 = vsub.s32 0, %v896
        %v898 = vsel %vm892, %v897, %v896
        %vm899 = vcmp.lt.s32.totalorder %v829, 0
        %v900 = vsub.s32 0, %v829
        %v901 = vsel %vm899, %v900, %v829
        %v902 = vshrl.u32 %v901, 4
        %v903 = vand.u32 %v901, 15
        %v904 = vsub.s32 0, %v903
        %v905 = vsel %vm899, %v904, %v903
        %vm906 = vcmp.lt.s32.totalorder %v830, 0
        %v907 = vsub.s32 0, %v830
        %v908 = vsel %vm906, %v907, %v830
        %v909 = vshrl.u32 %v908, 4
        %v910 = vand.u32 %v908, 15
        %v911 = vsub.s32 0, %v910
        %v912 = vsel %vm906, %v911, %v910
        %vm913 = vcmp.lt.s32.totalorder %v831, 0
        %v914 = vsub.s32 0, %v831
        %v915 = vsel %vm913, %v914, %v831
        %v916 = vshrl.u32 %v915, 4
        %v917 = vand.u32 %v915, 15
        %v918 = vsub.s32 0, %v917
        %v919 = vsel %vm913, %v918, %v917
        %vm920 = vcmp.lt.s32.totalorder %v832, 0
        %v921 = vsub.s32 0, %v832
        %v922 = vsel %vm920, %v921, %v832
        %v923 = vshrl.u32 %v922, 4
        %v924 = vand.u32 %v922, 15
        %v925 = vsub.s32 0, %v924
        %v926 = vsel %vm920, %v925, %v924
        %vm927 = vcmp.lt.s32.totalorder %v833, 0
        %v928 = vsub.s32 0, %v833
        %v929 = vsel %vm927, %v928, %v833
        %v930 = vshrl.u32 %v929, 4
        %v931 = vand.u32 %v929, 15
        %v932 = vsub.s32 0, %v931
        %v933 = vsel %vm927, %v932, %v931
        %vm934 = vcmp.lt.s32.totalorder %v834, 0
        %v935 = vsub.s32 0, %v834
        %v936 = vsel %vm934, %v935, %v834
        %v937 = vshrl.u32 %v936, 4
        %v938 = vand.u32 %v936, 15
        %v939 = vsub.s32 0, %v938
        %v940 = vsel %vm934, %v939, %v938
        %vm941 = vcmp.lt.s32.totalorder %v835, 0
        %v942 = vsub.s32 0, %v835
        %v943 = vsel %vm941, %v942, %v835
        %v944 = vshrl.u32 %v943, 4
        %v945 = vand.u32 %v943, 15
        %v946 = vsub.s32 0, %v945
        %v947 = vsel %vm941, %v946, %v945
        %vm948 = vcmp.ne.s32.totalorder %v842, 0
        %vm949 = vcmp.ne.s32.totalorder %v849, 0
        %vm950 = vcmp.ne.s32.totalorder %v856, 0
        %vm951 = vcmp.ne.s32.totalorder %v863, 0
        %vm952 = vcmp.ne.s32.totalorder %v870, 0
        %vm953 = vcmp.ne.s32.totalorder %v877, 0
        %vm954 = vcmp.ne.s32.totalorder %v884, 0
        %vm955 = vcmp.ne.s32.totalorder %v891, 0
        %vm956 = vcmp.ne.s32.totalorder %v898, 0
        %vm957 = vcmp.ne.s32.totalorder %v905, 0
        %vm958 = vcmp.ne.s32.totalorder %v912, 0
        %vm959 = vcmp.ne.s32.totalorder %v919, 0
        %vm960 = vcmp.ne.s32.totalorder %v926, 0
        %vm961 = vcmp.ne.s32.totalorder %v933, 0
        %vm962 = vcmp.ne.s32.totalorder %v940, 0
        %vm963 = vcmp.ne.s32.totalorder %v947, 0
        %vm964 = vcmp.lt.s32.totalorder %v842, 0
        %vm965 = vcmp.lt.s32.totalorder %v849, 0
        %vm966 = vcmp.lt.s32.totalorder %v856, 0
        %vm967 = vcmp.lt.s32.totalorder %v863, 0
        %vm968 = vcmp.lt.s32.totalorder %v870, 0
        %vm969 = vcmp.lt.s32.totalorder %v877, 0
        %vm970 = vcmp.lt.s32.totalorder %v884, 0
        %vm971 = vcmp.lt.s32.totalorder %v891, 0
        %vm972 = vcmp.lt.s32.totalorder %v898, 0
        %vm973 = vcmp.lt.s32.totalorder %v905, 0
        %vm974 = vcmp.lt.s32.totalorder %v912, 0
        %vm975 = vcmp.lt.s32.totalorder %v919, 0
        %vm976 = vcmp.lt.s32.totalorder %v926, 0
        %vm977 = vcmp.lt.s32.totalorder %v933, 0
        %vm978 = vcmp.lt.s32.totalorder %v940, 0
        %vm979 = vcmp.lt.s32.totalorder %v947, 0
        %vm980 = vmand %vm964, %vm948
        %vm981 = vmand %vm965, %vm949
        %vm982 = vmand %vm966, %vm950
        %vm983 = vmand %vm967, %vm951
        %vm984 = vmand %vm968, %vm952
        %vm985 = vmand %vm969, %vm953
        %vm986 = vmand %vm970, %vm954
        %vm987 = vmand %vm971, %vm955
        %vm988 = vmand %vm972, %vm956
        %vm989 = vmand %vm973, %vm957
        %vm990 = vmand %vm974, %vm958
        %vm991 = vmand %vm975, %vm959
        %vm992 = vmand %vm976, %vm960
        %vm993 = vmand %vm977, %vm961
        %vm994 = vmand %vm978, %vm962
        %vm995 = vmand %vm979, %vm963
        %v996 = vadd.s32 %v842, 16
        %v997 = vadd.s32 %v849, 16
        %v998 = vadd.s32 %v856, 16
        %v999 = vadd.s32 %v863, 16
        %v1000 = vadd.s32 %v870, 16
        %v1001 = vadd.s32 %v877, 16
        %v1002 = vadd.s32 %v884, 16
        %v1003 = vadd.s32 %v891, 16
        %v1004 = vadd.s32 %v898, 16
        %v1005 = vadd.s32 %v905, 16
        %v1006 = vadd.s32 %v912, 16
        %v1007 = vadd.s32 %v919, 16
        %v1008 = vadd.s32 %v926, 16
        %v1009 = vadd.s32 %v933, 16
        %v1010 = vadd.s32 %v940, 16
        %v1011 = vadd.s32 %v947, 16
        %v1012 = vsel %vm980, %v996, %v842
        %v1013 = vsel %vm981, %v997, %v849
        %v1014 = vsel %vm982, %v998, %v856
        %v1015 = vsel %vm983, %v999, %v863
        %v1016 = vsel %vm984, %v1000, %v870
        %v1017 = vsel %vm985, %v1001, %v877
        %v1018 = vsel %vm986, %v1002, %v884
        %v1019 = vsel %vm987, %v1003, %v891
        %v1020 = vsel %vm988, %v1004, %v898
        %v1021 = vsel %vm989, %v1005, %v905
        %v1022 = vsel %vm990, %v1006, %v912
        %v1023 = vsel %vm991, %v1007, %v919
        %v1024 = vsel %vm992, %v1008, %v926
        %v1025 = vsel %vm993, %v1009, %v933
        %v1026 = vsel %vm994, %v1010, %v940
        %v1027 = vsel %vm995, %v1011, %v947
        %vm1028 = vcmp.gt.s32.totalorder %v1012, 0
        %vm1029 = vcmp.gt.s32.totalorder %v1013, 0
        %vm1030 = vcmp.gt.s32.totalorder %v1014, 0
        %vm1031 = vcmp.gt.s32.totalorder %v1015, 0
        %vm1032 = vcmp.gt.s32.totalorder %v1016, 0
        %vm1033 = vcmp.gt.s32.totalorder %v1017, 0
        %vm1034 = vcmp.gt.s32.totalorder %v1018, 0
        %vm1035 = vcmp.gt.s32.totalorder %v1019, 0
        %vm1036 = vcmp.gt.s32.totalorder %v1020, 0
        %vm1037 = vcmp.gt.s32.totalorder %v1021, 0
        %vm1038 = vcmp.gt.s32.totalorder %v1022, 0
        %vm1039 = vcmp.gt.s32.totalorder %v1023, 0
        %vm1040 = vcmp.gt.s32.totalorder %v1024, 0
        %vm1041 = vcmp.gt.s32.totalorder %v1025, 0
        %vm1042 = vcmp.gt.s32.totalorder %v1026, 0
        %vm1043 = vcmp.gt.s32.totalorder %v1027, 0
        %v1044 = vrot.slane %v803, 7
        %v1045 = vrot.slane %v804, 7
        %v1046 = vrot.slane %v805, 7
        %v1047 = vrot.slane %v806, 7
        %v1048 = vrot.slane %v807, 7
        %v1049 = vrot.slane %v808, 7
        %v1050 = vrot.slane %v809, 7
        %v1051 = vrot.slane %v810, 7
        %v1052 = vrot.slane %v811, 7
        %v1053 = vrot.slane %v812, 7
        %v1054 = vrot.slane %v813, 7
        %v1055 = vrot.slane %v814, 7
        %v1056 = vrot.slane %v815, 7
        %v1057 = vrot.slane %v816, 7
        %v1058 = vrot.slane %v817, 7
        %v1059 = vrot.slane %v818, 7
        %vm1060 = vcmp.lt.s32.totalorder %v820, 1
        %v1061 = vsel %vm1060, %v1058, %v1059
        %v1062 = vsel %vm1060, %v1057, %v1058
        %v1063 = vsel %vm1060, %v1056, %v1057
        %v1064 = vsel %vm1060, %v1055, %v1056
        %v1065 = vsel %vm1060, %v1054, %v1055
        %v1066 = vsel %vm1060, %v1053, %v1054
        %v1067 = vsel %vm1060, %v1052, %v1053
        %v1068 = vsel %vm1060, %v1051, %v1052
        %v1069 = vsel %vm1060, %v1050, %v1051
        %v1070 = vsel %vm1060, %v1049, %v1050
        %v1071 = vsel %vm1060, %v1048, %v1049
        %v1072 = vsel %vm1060, %v1047, %v1048
        %v1073 = vsel %vm1060, %v1046, %v1047
        %v1074 = vsel %vm1060, %v1045, %v1046
        %v1075 = vsel %vm1060, %v1044, %v1045
        %v1076 = vsel %vm1060, %v1059, %v1044
        %v1077 = vsel %vm1028, 1, 0
        %v1078 = vsel %vm1029, 1, 0
        %v1079 = vsel %vm1030, 1, 0
        %v1080 = vsel %vm1031, 1, 0
        %v1081 = vsel %vm1032, 1, 0
        %v1082 = vsel %vm1033, 1, 0
        %v1083 = vsel %vm1034, 1, 0
        %v1084 = vsel %vm1035, 1, 0
        %v1085 = vsel %vm1036, 1, 0
        %v1086 = vsel %vm1037, 1, 0
        %v1087 = vsel %vm1038, 1, 0
        %v1088 = vsel %vm1039, 1, 0
        %v1089 = vsel %vm1040, 1, 0
        %v1090 = vsel %vm1041, 1, 0
        %v1091 = vsel %vm1042, 1, 0
        %v1092 = vsel %vm1043, 1, 0
        %vm1093 = vcmp.eq.s32.totalorder %v1077, 1
        %vm1094 = vcmp.eq.s32.totalorder %v1078, 1
        %vm1095 = vcmp.eq.s32.totalorder %v1079, 1
        %vm1096 = vcmp.eq.s32.totalorder %v1080, 1
        %vm1097 = vcmp.eq.s32.totalorder %v1081, 1
        %vm1098 = vcmp.eq.s32.totalorder %v1082, 1
        %vm1099 = vcmp.eq.s32.totalorder %v1083, 1
        %vm1100 = vcmp.eq.s32.totalorder %v1084, 1
        %vm1101 = vcmp.eq.s32.totalorder %v1085, 1
        %vm1102 = vcmp.eq.s32.totalorder %v1086, 1
        %vm1103 = vcmp.eq.s32.totalorder %v1087, 1
        %vm1104 = vcmp.eq.s32.totalorder %v1088, 1
        %vm1105 = vcmp.eq.s32.totalorder %v1089, 1
        %vm1106 = vcmp.eq.s32.totalorder %v1090, 1
        %vm1107 = vcmp.eq.s32.totalorder %v1091, 1
        %vm1108 = vcmp.eq.s32.totalorder %v1092, 1
        %v1109 = vsel %vm1093, %v1076, 0.0
        %v1110 = vsel %vm1094, %v1075, 0.0
        %v1111 = vsel %vm1095, %v1074, 0.0
        %v1112 = vsel %vm1096, %v1073, 0.0
        %v1113 = vsel %vm1097, %v1072, 0.0
        %v1114 = vsel %vm1098, %v1071, 0.0
        %v1115 = vsel %vm1099, %v1070, 0.0
        %v1116 = vsel %vm1100, %v1069, 0.0
        %v1117 = vsel %vm1101, %v1068, 0.0
        %v1118 = vsel %vm1102, %v1067, 0.0
        %v1119 = vsel %vm1103, %v1066, 0.0
        %v1120 = vsel %vm1104, %v1065, 0.0
        %v1121 = vsel %vm1105, %v1064, 0.0
        %v1122 = vsel %vm1106, %v1063, 0.0
        %v1123 = vsel %vm1107, %v1062, 0.0
        %v1124 = vsel %vm1108, %v1061, 0.0
        %vm1125 = vcmp.lt.s32.totalorder %v1012, 15
        %vm1126 = vcmp.lt.s32.totalorder %v1013, 15
        %vm1127 = vcmp.lt.s32.totalorder %v1014, 15
        %vm1128 = vcmp.lt.s32.totalorder %v1015, 15
        %vm1129 = vcmp.lt.s32.totalorder %v1016, 15
        %vm1130 = vcmp.lt.s32.totalorder %v1017, 15
        %vm1131 = vcmp.lt.s32.totalorder %v1018, 15
        %vm1132 = vcmp.lt.s32.totalorder %v1019, 15
        %vm1133 = vcmp.lt.s32.totalorder %v1020, 15
        %vm1134 = vcmp.lt.s32.totalorder %v1021, 15
        %vm1135 = vcmp.lt.s32.totalorder %v1022, 15
        %vm1136 = vcmp.lt.s32.totalorder %v1023, 15
        %vm1137 = vcmp.lt.s32.totalorder %v1024, 15
        %vm1138 = vcmp.lt.s32.totalorder %v1025, 15
        %vm1139 = vcmp.lt.s32.totalorder %v1026, 15
        %vm1140 = vcmp.lt.s32.totalorder %v1027, 15
        %v1141 = vrot.slane %v803, 1
        %v1142 = vrot.slane %v804, 1
        %v1143 = vrot.slane %v805, 1
        %v1144 = vrot.slane %v806, 1
        %v1145 = vrot.slane %v807, 1
        %v1146 = vrot.slane %v808, 1
        %v1147 = vrot.slane %v809, 1
        %v1148 = vrot.slane %v810, 1
        %v1149 = vrot.slane %v811, 1
        %v1150 = vrot.slane %v812, 1
        %v1151 = vrot.slane %v813, 1
        %v1152 = vrot.slane %v814, 1
        %v1153 = vrot.slane %v815, 1
        %v1154 = vrot.slane %v816, 1
        %v1155 = vrot.slane %v817, 1
        %v1156 = vrot.slane %v818, 1
        %vm1157 = vcmp.lt.s32.totalorder %v820, 7
        %v1158 = vsel %vm1157, %v1155, %v1156
        %v1159 = vsel %vm1157, %v1154, %v1155
        %v1160 = vsel %vm1157, %v1153, %v1154
        %v1161 = vsel %vm1157, %v1152, %v1153
        %v1162 = vsel %vm1157, %v1151, %v1152
        %v1163 = vsel %vm1157, %v1150, %v1151
        %v1164 = vsel %vm1157, %v1149, %v1150
        %v1165 = vsel %vm1157, %v1148, %v1149
        %v1166 = vsel %vm1157, %v1147, %v1148
        %v1167 = vsel %vm1157, %v1146, %v1147
        %v1168 = vsel %vm1157, %v1145, %v1146
        %v1169 = vsel %vm1157, %v1144, %v1145
        %v1170 = vsel %vm1157, %v1143, %v1144
        %v1171 = vsel %vm1157, %v1142, %v1143
        %v1172 = vsel %vm1157, %v1141, %v1142
        %v1173 = vsel %vm1157, %v1156, %v1141
        %v1174 = vsel %vm1125, 1, 0
        %v1175 = vsel %vm1126, 1, 0
        %v1176 = vsel %vm1127, 1, 0
        %v1177 = vsel %vm1128, 1, 0
        %v1178 = vsel %vm1129, 1, 0
        %v1179 = vsel %vm1130, 1, 0
        %v1180 = vsel %vm1131, 1, 0
        %v1181 = vsel %vm1132, 1, 0
        %v1182 = vsel %vm1133, 1, 0
        %v1183 = vsel %vm1134, 1, 0
        %v1184 = vsel %vm1135, 1, 0
        %v1185 = vsel %vm1136, 1, 0
        %v1186 = vsel %vm1137, 1, 0
        %v1187 = vsel %vm1138, 1, 0
        %v1188 = vsel %vm1139, 1, 0
        %v1189 = vsel %vm1140, 1, 0
        %vm1190 = vcmp.eq.s32.totalorder %v1174, 1
        %vm1191 = vcmp.eq.s32.totalorder %v1175, 1
        %vm1192 = vcmp.eq.s32.totalorder %v1176, 1
        %vm1193 = vcmp.eq.s32.totalorder %v1177, 1
        %vm1194 = vcmp.eq.s32.totalorder %v1178, 1
        %vm1195 = vcmp.eq.s32.totalorder %v1179, 1
        %vm1196 = vcmp.eq.s32.totalorder %v1180, 1
        %vm1197 = vcmp.eq.s32.totalorder %v1181, 1
        %vm1198 = vcmp.eq.s32.totalorder %v1182, 1
        %vm1199 = vcmp.eq.s32.totalorder %v1183, 1
        %vm1200 = vcmp.eq.s32.totalorder %v1184, 1
        %vm1201 = vcmp.eq.s32.totalorder %v1185, 1
        %vm1202 = vcmp.eq.s32.totalorder %v1186, 1
        %vm1203 = vcmp.eq.s32.totalorder %v1187, 1
        %vm1204 = vcmp.eq.s32.totalorder %v1188, 1
        %vm1205 = vcmp.eq.s32.totalorder %v1189, 1
        %v1206 = vsel %vm1190, %v1172, 0.0
        %v1207 = vsel %vm1191, %v1171, 0.0
        %v1208 = vsel %vm1192, %v1170, 0.0
        %v1209 = vsel %vm1193, %v1169, 0.0
        %v1210 = vsel %vm1194, %v1168, 0.0
        %v1211 = vsel %vm1195, %v1167, 0.0
        %v1212 = vsel %vm1196, %v1166, 0.0
        %v1213 = vsel %vm1197, %v1165, 0.0
        %v1214 = vsel %vm1198, %v1164, 0.0
        %v1215 = vsel %vm1199, %v1163, 0.0
        %v1216 = vsel %vm1200, %v1162, 0.0
        %v1217 = vsel %vm1201, %v1161, 0.0
        %v1218 = vsel %vm1202, %v1160, 0.0
        %v1219 = vsel %vm1203, %v1159, 0.0
        %v1220 = vsel %vm1204, %v1158, 0.0
        %v1221 = vsel %vm1205, %v1173, 0.0
        %1238 = vrot.lane.b32.xlu0 %v803, 4
        %v1239 = vpop.permute.xlu0 %1238
        %1240 = vrot.lane.b32.xlu0 %v804, 4
        %v1241 = vpop.permute.xlu0 %1240
        %1242 = vrot.lane.b32.xlu0 %v805, 4
        %v1243 = vpop.permute.xlu0 %1242
        %1244 = vrot.lane.b32.xlu0 %v806, 4
        %v1245 = vpop.permute.xlu0 %1244
        %1246 = vrot.lane.b32.xlu0 %v807, 4
        %v1247 = vpop.permute.xlu0 %1246
        %1248 = vrot.lane.b32.xlu0 %v808, 4
        %v1249 = vpop.permute.xlu0 %1248
        %1250 = vrot.lane.b32.xlu0 %v809, 4
        %v1251 = vpop.permute.xlu0 %1250
        %1252 = vrot.lane.b32.xlu0 %v810, 4
        %v1253 = vpop.permute.xlu0 %1252
        %1254 = vrot.lane.b32.xlu0 %v811, 4
        %v1255 = vpop.permute.xlu0 %1254
        %1256 = vrot.lane.b32.xlu0 %v812, 4
        %v1257 = vpop.permute.xlu0 %1256
        %1258 = vrot.lane.b32.xlu0 %v813, 4
        %v1259 = vpop.permute.xlu0 %1258
        %1260 = vrot.lane.b32.xlu0 %v814, 4
        %v1261 = vpop.permute.xlu0 %1260
        %1262 = vrot.lane.b32.xlu0 %v815, 4
        %v1263 = vpop.permute.xlu0 %1262
        %1264 = vrot.lane.b32.xlu0 %v816, 4
        %v1265 = vpop.permute.xlu0 %1264
        %1266 = vrot.lane.b32.xlu0 %v817, 4
        %v1267 = vpop.permute.xlu0 %1266
        %1268 = vrot.lane.b32.xlu0 %v818, 4
        %v1269 = vpop.permute.xlu0 %1268
        %1302 = vrot.lane.b32.xlu0 %v1206, 8
        %v1303 = vpop.permute.xlu0 %1302
        %1304 = vrot.lane.b32.xlu0 %v1207, 8
        %v1305 = vpop.permute.xlu0 %1304
        %1306 = vrot.lane.b32.xlu0 %v1208, 8
        %v1307 = vpop.permute.xlu0 %1306
        %1308 = vrot.lane.b32.xlu0 %v1209, 8
        %v1309 = vpop.permute.xlu0 %1308
        %1310 = vrot.lane.b32.xlu0 %v1210, 8
        %v1311 = vpop.permute.xlu0 %1310
        %1312 = vrot.lane.b32.xlu0 %v1211, 8
        %v1313 = vpop.permute.xlu0 %1312
        %1314 = vrot.lane.b32.xlu0 %v1212, 8
        %v1315 = vpop.permute.xlu0 %1314
        %1316 = vrot.lane.b32.xlu0 %v1213, 8
        %v1317 = vpop.permute.xlu0 %1316
        %1318 = vrot.lane.b32.xlu0 %v1214, 8
        %v1319 = vpop.permute.xlu0 %1318
        %1320 = vrot.lane.b32.xlu0 %v1215, 8
        %v1321 = vpop.permute.xlu0 %1320
        %1322 = vrot.lane.b32.xlu0 %v1216, 8
        %v1323 = vpop.permute.xlu0 %1322
        %1324 = vrot.lane.b32.xlu0 %v1217, 8
        %v1325 = vpop.permute.xlu0 %1324
        %1326 = vrot.lane.b32.xlu0 %v1218, 8
        %v1327 = vpop.permute.xlu0 %1326
        %1328 = vrot.lane.b32.xlu0 %v1219, 8
        %v1329 = vpop.permute.xlu0 %1328
        %1330 = vrot.lane.b32.xlu0 %v1220, 8
        %v1331 = vpop.permute.xlu0 %1330
        %1332 = vrot.lane.b32.xlu0 %v1221, 8
        %v1333 = vpop.permute.xlu0 %1332
        %vm1350 = vcmask 31744
        %v1351 = vsel %vm1350, %v1109, %v1239
        %v1352 = vsel %vm1350, %v1110, %v1241
        %v1353 = vsel %vm1350, %v1111, %v1243
        %v1354 = vsel %vm1350, %v1112, %v1245
        %v1355 = vsel %vm1350, %v1113, %v1247
        %v1356 = vsel %vm1350, %v1114, %v1249
        %v1357 = vsel %vm1350, %v1115, %v1251
        %v1358 = vsel %vm1350, %v1116, %v1253
        %v1359 = vsel %vm1350, %v1117, %v1255
        %v1360 = vsel %vm1350, %v1118, %v1257
        %v1361 = vsel %vm1350, %v1119, %v1259
        %v1362 = vsel %vm1350, %v1120, %v1261
        %v1363 = vsel %vm1350, %v1121, %v1263
        %v1364 = vsel %vm1350, %v1122, %v1265
        %v1365 = vsel %vm1350, %v1123, %v1267
        %v1366 = vsel %vm1350, %v1124, %v1269
        %vm1367 = vcmask 64512
        %v1368 = vsel %vm1367, %v1351, %v1303
        %v1369 = vsel %vm1367, %v1352, %v1305
        %v1370 = vsel %vm1367, %v1353, %v1307
        %v1371 = vsel %vm1367, %v1354, %v1309
        %v1372 = vsel %vm1367, %v1355, %v1311
        %v1373 = vsel %vm1367, %v1356, %v1313
        %v1374 = vsel %vm1367, %v1357, %v1315
        %v1375 = vsel %vm1367, %v1358, %v1317
        %v1376 = vsel %vm1367, %v1359, %v1319
        %v1377 = vsel %vm1367, %v1360, %v1321
        %v1378 = vsel %vm1367, %v1361, %v1323
        %v1379 = vsel %vm1367, %v1362, %v1325
        %v1380 = vsel %vm1367, %v1363, %v1327
        %v1381 = vsel %vm1367, %v1364, %v1329
        %v1382 = vsel %vm1367, %v1365, %v1331
        %v1383 = vsel %vm1367, %v1366, %v1333
        %v1384 = vpack.c.bf16 %v1369, %v1368
        %v1385 = vpack.c.bf16 %v1371, %v1370
        %v1386 = vpack.c.bf16 %v1373, %v1372
        %v1387 = vpack.c.bf16 %v1375, %v1374
        %v1388 = vpack.c.bf16 %v1377, %v1376
        %v1389 = vpack.c.bf16 %v1379, %v1378
        %v1390 = vpack.c.bf16 %v1381, %v1380
        %v1391 = vpack.c.bf16 %v1383, %v1382
        %v1400 = vunpack.c.l.b16 %v1384
        %v1401 = vunpack.c.h.b16 %v1384
        %v1402 = vunpack.c.l.b16 %v1385
        %v1403 = vunpack.c.h.b16 %v1385
        %v1404 = vunpack.c.l.b16 %v1386
        %v1405 = vunpack.c.h.b16 %v1386
        %v1406 = vunpack.c.l.b16 %v1387
        %v1407 = vunpack.c.h.b16 %v1387
        %v1408 = vunpack.c.l.b16 %v1388
        %v1409 = vunpack.c.h.b16 %v1388
        %v1410 = vunpack.c.l.b16 %v1389
        %v1411 = vunpack.c.h.b16 %v1389
        %v1412 = vunpack.c.l.b16 %v1390
        %v1413 = vunpack.c.h.b16 %v1390
        %v1414 = vunpack.c.l.b16 %v1391
        %v1415 = vunpack.c.h.b16 %v1391
        %v1416 = vpack.c.b16 %v1400, %v1400
        %v1417 = vpack.c.b16 %v1401, %v1401
        %v1418 = vpack.c.b16 %v1402, %v1402
        %v1419 = vpack.c.b16 %v1403, %v1403
        %v1420 = vpack.c.b16 %v1404, %v1404
        %v1421 = vpack.c.b16 %v1405, %v1405
        %v1422 = vpack.c.b16 %v1406, %v1406
        %v1423 = vpack.c.b16 %v1407, %v1407
        %v1424 = vpack.c.b16 %v1408, %v1408
        %v1425 = vpack.c.b16 %v1409, %v1409
        %v1426 = vpack.c.b16 %v1410, %v1410
        %v1427 = vpack.c.b16 %v1411, %v1411
        %v1428 = vpack.c.b16 %v1412, %v1412
        %v1429 = vpack.c.b16 %v1413, %v1413
        %v1430 = vpack.c.b16 %v1414, %v1414
        %v1431 = vpack.c.b16 %v1415, %v1415
        %s1448 = scalar_lea.vmem [#allocation2], 8
        %vm1449 = vcmask 93184
        %1450 = vst.msk [vmem:[%s1448] sm:$0xf] %vm1449, %v1416
        %1451 = vst.msk [vmem:[%s1448 + $0x4] sm:$0xf] %vm1449, %v1417
        %1452 = vst.msk [vmem:[%s1448 + $0x8] sm:$0xf] %vm1449, %v1418
        %1453 = vst.msk [vmem:[%s1448 + $0xc] sm:$0xf] %vm1449, %v1419
        %1454 = vst.msk [vmem:[%s1448 + $0x10] sm:$0xf] %vm1449, %v1420
        %1455 = vst.msk [vmem:[%s1448 + $0x14] sm:$0xf] %vm1449, %v1421
        %1456 = vst.msk [vmem:[%s1448 + $0x18] sm:$0xf] %vm1449, %v1422
        %1457 = vst.msk [vmem:[%s1448 + $0x1c] sm:$0xf] %vm1449, %v1423
        %1458 = vst.msk [vmem:[%s1448 + $0x20] sm:$0xf] %vm1449, %v1424
        %1459 = vst.msk [vmem:[%s1448 + $0x24] sm:$0xf] %vm1449, %v1425
        %1460 = vst.msk [vmem:[%s1448 + $0x28] sm:$0xf] %vm1449, %v1426
        %1461 = vst.msk [vmem:[%s1448 + $0x2c] sm:$0xf] %vm1449, %v1427
        %1462 = vst.msk [vmem:[%s1448 + $0x30] sm:$0xf] %vm1449, %v1428
        %1463 = vst.msk [vmem:[%s1448 + $0x34] sm:$0xf] %vm1449, %v1429
        %1464 = vst.msk [vmem:[%s1448 + $0x38] sm:$0xf] %vm1449, %v1430
        %1465 = vst.msk [vmem:[%s1448 + $0x3c] sm:$0xf] %vm1449, %v1431
        %p1466 = scmp.eq.s32.totalorder %s37, 0
        // Predicated region
        $region81: #{tpu_custom_call.1} parent=67 // pred_check
          %p1467 = pneg %p1466
        $region82: #{tpu_custom_call.1} parent=67 // pred_check_branch
          %1469 = sbr.rel (%p1467) target = $region84
        $region83: #{tpu_custom_call.1} parent=67 // pred_region
          %1470 = vst.msk [vmem:[#allocation2] sm:$0xf] %vm1449, 0
          %1471 = vst.msk [vmem:[#allocation2 + $0x4] sm:$0xf] %vm1449, 0
        $region84: #{tpu_custom_call.1} parent=67 // pred_fallthru
          _
        %p1472 = scmp.gt.s32.totalorder %s37, 0
        // Predicated region
        $region85: #{tpu_custom_call.1} parent=67 // pred_check
          %p1473 = pneg %p1472
        $region86: #{tpu_custom_call.1} parent=67 // pred_check_branch
          %1475 = sbr.rel (%p1473) target = $region88
        $region87: #{tpu_custom_call.1} parent=67 // pred_region
          %v1476 = vld [vmem:[%s491] sm:$0xf]
          %v1477 = vld [vmem:[%s491 + $0x4] sm:$0xf]
          %v1478 = vld [vmem:[%s3] sm:$0xf]
          %v1479 = vld [vmem:[%s3 + $0x4] sm:$0xf]
          %v1482 = vunpack.c.l.b16 %v1476
          %v1483 = vunpack.c.l.b16 %v1477
          %v1484 = vpack.c.b16 %v1483, %v1482
          %v1487 = vunpack.c.l.b16 %v1478
          %v1488 = vunpack.c.l.b16 %v1479
          %v1489 = vpack.c.b16 %v1488, %v1487
          %v1492 = vsel %vm635, %v1484, 0
          %1494 = vmatprep.subr.bf16.mxu0 0
          %1495 = vmatpush1.bf16.msra.mxu0 0
          %1496 = vmatprep.subr.bf16.mxu0 0
          %1497 = vmatpush1.bf16.msra.mxu0 0
          %1498 = vmatprep.subr.bf16.mxu0 0
          %1499 = vmatpush1.bf16.msra.mxu0 0
          %1500 = vmatprep.subr.bf16.mxu0 0
          %1501 = vmatpush1.bf16.msra.mxu0 0
          %1502 = vmatprep.subr.bf16.mxu0 0
          %1503 = vmatpush1.bf16.msra.mxu0 0
          %1504 = vmatprep.subr.bf16.mxu0 0
          %1505 = vmatpush1.bf16.msra.mxu0 0
          %1506 = vmatprep.subr.bf16.mxu0 0
          %1507 = vmatpush1.bf16.msra.mxu0 0
          %1508 = vmatprep.subr.bf16.mxu0 0
          %1509 = vmatpush1.bf16.msra.mxu0 %v1489
          %1510 = vmatprep.subr.bf16.mxu0 0
          %1511 = vmatpush2.bf16.msra.mxu0 0
          %1512 = vmatprep.subr.bf16.mxu0 0
          %1513 = vmatpush2.bf16.msra.mxu0 0
          %1514 = vmatprep.subr.bf16.mxu0 0
          %1515 = vmatpush2.bf16.msra.mxu0 0
          %1516 = vmatprep.subr.bf16.mxu0 0
          %1517 = vmatpush2.bf16.msra.mxu0 0
          %1518 = vmatprep.subr.bf16.mxu0 0
          %1519 = vmatpush2.bf16.msra.mxu0 0
          %1520 = vmatprep.subr.bf16.mxu0 0
          %1521 = vmatpush2.bf16.msra.mxu0 0
          %1522 = vmatprep.subr.bf16.mxu0 0
          %1523 = vmatpush2.bf16.msra.mxu0 0
          %1524 = vmatprep.subr.bf16.mxu0 0
          %1525 = vmatpush2.bf16.msra.mxu0 0
          %1526 = vmatprep.mubr.bf16.mxu0 0
          %1527 = vmatmul.mubr.bf16.gmra.mxu0 %v1492
          %v1528 = vpop.f32.mrf.mxu0
          %v1529 = vadd.f32 0.0, %v1528
          %v1530 = vpop.f32.mrf.mxu0
          %v1531 = vpop.f32.mrf.mxu0
          %v1532 = vadd.f32 0.0, %v1531
          %v1533 = vpop.f32.mrf.mxu0
          %1534 = vdwg.mxu0
          %v1535 = vld [vmem:[%s6] sm:$0x1]
          %v1537 = vlaneseq
          %v1538 = vshrl.u32 %v1537, 7
          %v1539 = vsub.s32 0, %v1538
          %v1540 = vrot.slane %v1535, %v1539
          %v1542 = vmul.f32 %v1529, %v1540
          %v1543 = vmul.f32 %v1532, %v1540
          %v1544 = vld [vmem:[%s7] sm:$0x1]
          %v1546 = vlaneseq
          %v1547 = vshrl.u32 %v1546, 7
          %v1548 = vsub.s32 0, %v1547
          %v1549 = vrot.slane %v1544, %v1548
          %v1551 = vadd.f32 %v1542, %v1549
          %v1552 = vadd.f32 %v1543, %v1549
          %v1553 = vmax.f32 %v1551, 0.0
          %v1554 = vmax.f32 %v1552, 0.0
          %v1555 = vrot.slane %v1553, 7
          %v1556 = vrot.slane %v1554, 7
          %v1557 = vsel %vm1060, %v1555, %v1556
          %v1558 = vsel %vm1060, %v1556, %v1555
          %v1559 = vsel %vm1093, %v1558, 0.0
          %v1560 = vsel %vm1094, %v1557, 0.0
          %v1561 = vrot.slane %v1553, 1
          %v1562 = vrot.slane %v1554, 1
          %v1563 = vsel %vm1157, %v1561, %v1562
          %v1564 = vsel %vm1157, %v1562, %v1561
          %v1565 = vsel %vm1190, %v1563, 0.0
          %v1566 = vsel %vm1191, %v1564, 0.0
          %1569 = vrot.lane.b32.xlu0 %v1553, 4
          %v1570 = vpop.permute.xlu0 %1569
          %1571 = vrot.lane.b32.xlu0 %v1554, 4
          %v1572 = vpop.permute.xlu0 %1571
          %1577 = vrot.lane.b32.xlu0 %v1565, 8
          %v1578 = vpop.permute.xlu0 %1577
          %1579 = vrot.lane.b32.xlu0 %v1566, 8
          %v1580 = vpop.permute.xlu0 %1579
          %v1583 = vsel %vm1350, %v1559, %v1570
          %v1584 = vsel %vm1350, %v1560, %v1572
          %v1585 = vsel %vm1367, %v1583, %v1578
          %v1586 = vsel %vm1367, %v1584, %v1580
          %v1587 = vpack.c.bf16 %v1586, %v1585
          %v1589 = vunpack.c.l.b16 %v1587
          %v1590 = vunpack.c.h.b16 %v1587
          %v1591 = vpack.c.b16 %v1589, %v1589
          %v1592 = vpack.c.b16 %v1590, %v1590
          %1595 = vst.msk [vmem:[#allocation2] sm:$0xf] %vm1449, %v1591
          %1596 = vst.msk [vmem:[#allocation2 + $0x4] sm:$0xf] %vm1449, %v1592
        $region88: #{tpu_custom_call.1} parent=67 // pred_fallthru
          _
        %p1597 = scmp.eq.s32.totalorder %s37, 1
        // Predicated region
        $region89: #{tpu_custom_call.1} parent=67 // pred_check
          %p1598 = pneg %p1597
        $region90: #{tpu_custom_call.1} parent=67 // pred_check_branch
          %1600 = sbr.rel (%p1598) target = $region92
        $region91: #{tpu_custom_call.1} parent=67 // pred_region
          %s1601 = scalar_lea.vmem [#allocation2], 72
          %1602 = vst.msk [vmem:[%s1601] sm:$0xf] %vm1449, 0
          %1603 = vst.msk [vmem:[%s1601 + $0x4] sm:$0xf] %vm1449, 0
        $region92: #{tpu_custom_call.1} parent=67 // pred_fallthru
          _
        %p1604 = scmp.lt.s32.totalorder %s37, 1
        // Predicated region
        $region93: #{tpu_custom_call.1} parent=67 // pred_check
          %p1605 = pneg %p1604
        $region94: #{tpu_custom_call.1} parent=67 // pred_check_branch
          %1607 = sbr.rel (%p1605) target = $region96
        $region95: #{tpu_custom_call.1} parent=67 // pred_region
          %v1608 = vld [vmem:[%s509] sm:$0xf]
          %v1609 = vld [vmem:[%s509 + $0x4] sm:$0xf]
          %v1610 = vld [vmem:[%s3] sm:$0xf]
          %v1611 = vld [vmem:[%s3 + $0x4] sm:$0xf]
          %v1614 = vunpack.c.l.b16 %v1608
          %v1615 = vunpack.c.l.b16 %v1609
          %v1616 = vpack.c.b16 %v1615, %v1614
          %v1619 = vunpack.c.l.b16 %v1610
          %v1620 = vunpack.c.l.b16 %v1611
          %v1621 = vpack.c.b16 %v1620, %v1619
          %v1624 = vsel %vm635, %v1616, 0
          %1626 = vmatprep.subr.bf16.mxu0 0
          %1627 = vmatpush1.bf16.msra.mxu0 0
          %1628 = vmatprep.subr.bf16.mxu0 0
          %1629 = vmatpush1.bf16.msra.mxu0 0
          %1630 = vmatprep.subr.bf16.mxu0 0
          %1631 = vmatpush1.bf16.msra.mxu0 0
          %1632 = vmatprep.subr.bf16.mxu0 0
          %1633 = vmatpush1.bf16.msra.mxu0 0
          %1634 = vmatprep.subr.bf16.mxu0 0
          %1635 = vmatpush1.bf16.msra.mxu0 0
          %1636 = vmatprep.subr.bf16.mxu0 0
          %1637 = vmatpush1.bf16.msra.mxu0 0
          %1638 = vmatprep.subr.bf16.mxu0 0
          %1639 = vmatpush1.bf16.msra.mxu0 0
          %1640 = vmatprep.subr.bf16.mxu0 0
          %1641 = vmatpush1.bf16.msra.mxu0 %v1621
          %1642 = vmatprep.subr.bf16.mxu0 0
          %1643 = vmatpush2.bf16.msra.mxu0 0
          %1644 = vmatprep.subr.bf16.mxu0 0
          %1645 = vmatpush2.bf16.msra.mxu0 0
          %1646 = vmatprep.subr.bf16.mxu0 0
          %1647 = vmatpush2.bf16.msra.mxu0 0
          %1648 = vmatprep.subr.bf16.mxu0 0
          %1649 = vmatpush2.bf16.msra.mxu0 0
          %1650 = vmatprep.subr.bf16.mxu0 0
          %1651 = vmatpush2.bf16.msra.mxu0 0
          %1652 = vmatprep.subr.bf16.mxu0 0
          %1653 = vmatpush2.bf16.msra.mxu0 0
          %1654 = vmatprep.subr.bf16.mxu0 0
          %1655 = vmatpush2.bf16.msra.mxu0 0
          %1656 = vmatprep.subr.bf16.mxu0 0
          %1657 = vmatpush2.bf16.msra.mxu0 0
          %1658 = vmatprep.mubr.bf16.mxu0 0
          %1659 = vmatmul.mubr.bf16.gmra.mxu0 %v1624
          %v1660 = vpop.f32.mrf.mxu0
          %v1661 = vadd.f32 0.0, %v1660
          %v1662 = vpop.f32.mrf.mxu0
          %v1663 = vpop.f32.mrf.mxu0
          %v1664 = vadd.f32 0.0, %v1663
          %v1665 = vpop.f32.mrf.mxu0
          %1666 = vdwg.mxu0
          %v1667 = vld [vmem:[%s6] sm:$0x1]
          %v1669 = vlaneseq
          %v1670 = vshrl.u32 %v1669, 7
          %v1671 = vsub.s32 0, %v1670
          %v1672 = vrot.slane %v1667, %v1671
          %v1674 = vmul.f32 %v1661, %v1672
          %v1675 = vmul.f32 %v1664, %v1672
          %v1676 = vld [vmem:[%s7] sm:$0x1]
          %v1678 = vlaneseq
          %v1679 = vshrl.u32 %v1678, 7
          %v1680 = vsub.s32 0, %v1679
          %v1681 = vrot.slane %v1676, %v1680
          %v1683 = vadd.f32 %v1674, %v1681
          %v1684 = vadd.f32 %v1675, %v1681
          %v1685 = vmax.f32 %v1683, 0.0
          %v1686 = vmax.f32 %v1684, 0.0
          %v1687 = vrot.slane %v1685, 7
          %v1688 = vrot.slane %v1686, 7
          %v1689 = vsel %vm1060, %v1687, %v1688
          %v1690 = vsel %vm1060, %v1688, %v1687
          %v1691 = vsel %vm1093, %v1690, 0.0
          %v1692 = vsel %vm1094, %v1689, 0.0
          %v1693 = vrot.slane %v1685, 1
          %v1694 = vrot.slane %v1686, 1
          %v1695 = vsel %vm1157, %v1693, %v1694
          %v1696 = vsel %vm1157, %v1694, %v1693
          %v1697 = vsel %vm1190, %v1695, 0.0
          %v1698 = vsel %vm1191, %v1696, 0.0
          %1701 = vrot.lane.b32.xlu0 %v1685, 4
          %v1702 = vpop.permute.xlu0 %1701
          %1703 = vrot.lane.b32.xlu0 %v1686, 4
          %v1704 = vpop.permute.xlu0 %1703
          %1709 = vrot.lane.b32.xlu0 %v1697, 8
          %v1710 = vpop.permute.xlu0 %1709
          %1711 = vrot.lane.b32.xlu0 %v1698, 8
          %v1712 = vpop.permute.xlu0 %1711
          %v1715 = vsel %vm1350, %v1691, %v1702
          %v1716 = vsel %vm1350, %v1692, %v1704
          %v1717 = vsel %vm1367, %v1715, %v1710
          %v1718 = vsel %vm1367, %v1716, %v1712
          %v1719 = vpack.c.bf16 %v1718, %v1717
          %v1721 = vunpack.c.l.b16 %v1719
          %v1722 = vunpack.c.h.b16 %v1719
          %v1723 = vpack.c.b16 %v1721, %v1721
          %v1724 = vpack.c.b16 %v1722, %v1722
          %s1727 = scalar_lea.vmem [#allocation2], 72
          %1728 = vst.msk [vmem:[%s1727] sm:$0xf] %vm1449, %v1723
          %1729 = vst.msk [vmem:[%s1727 + $0x4] sm:$0xf] %vm1449, %v1724
        $region96: #{tpu_custom_call.1} parent=67 // pred_fallthru
          _
        %v1730 = vld [vmem:[#allocation2] sm:$0xf]
        %v1731 = vld [vmem:[#allocation2 + $0x4] sm:$0xf]
        %v1732 = vld [vmem:[#allocation2 + $0x8] sm:$0xf]
        %v1733 = vld [vmem:[#allocation2 + $0xc] sm:$0xf]
        %v1734 = vld [vmem:[#allocation2 + $0x10] sm:$0xf]
        %v1735 = vld [vmem:[#allocation2 + $0x14] sm:$0xf]
        %v1736 = vld [vmem:[#allocation2 + $0x18] sm:$0xf]
        %v1737 = vld [vmem:[#allocation2 + $0x1c] sm:$0xf]
        %v1738 = vld [vmem:[#allocation2 + $0x20] sm:$0xf]
        %v1739 = vld [vmem:[#allocation2 + $0x24] sm:$0xf]
        %v1740 = vld [vmem:[#allocation2 + $0x28] sm:$0xf]
        %v1741 = vld [vmem:[#allocation2 + $0x2c] sm:$0xf]
        %v1742 = vld [vmem:[#allocation2 + $0x30] sm:$0xf]
        %v1743 = vld [vmem:[#allocation2 + $0x34] sm:$0xf]
        %v1744 = vld [vmem:[#allocation2 + $0x38] sm:$0xf]
        %v1745 = vld [vmem:[#allocation2 + $0x3c] sm:$0xf]
        %v1746 = vld [vmem:[%s4] sm:$0xf]
        %v1747 = vld [vmem:[%s4 + $0x4] sm:$0x3]
        %v1748 = vld [vmem:[%s1448] sm:$0xf]
        %v1749 = vld [vmem:[%s1448 + $0x4] sm:$0xf]
        %v1750 = vld [vmem:[%s1448 + $0x8] sm:$0xf]
        %v1751 = vld [vmem:[%s1448 + $0xc] sm:$0xf]
        %v1752 = vld [vmem:[%s1448 + $0x10] sm:$0xf]
        %v1753 = vld [vmem:[%s1448 + $0x14] sm:$0xf]
        %v1754 = vld [vmem:[%s1448 + $0x18] sm:$0xf]
        %v1755 = vld [vmem:[%s1448 + $0x1c] sm:$0xf]
        %v1756 = vld [vmem:[%s1448 + $0x20] sm:$0xf]
        %v1757 = vld [vmem:[%s1448 + $0x24] sm:$0xf]
        %v1758 = vld [vmem:[%s1448 + $0x28] sm:$0xf]
        %v1759 = vld [vmem:[%s1448 + $0x2c] sm:$0xf]
        %v1760 = vld [vmem:[%s1448 + $0x30] sm:$0xf]
        %v1761 = vld [vmem:[%s1448 + $0x34] sm:$0xf]
        %v1762 = vld [vmem:[%s1448 + $0x38] sm:$0xf]
        %v1763 = vld [vmem:[%s1448 + $0x3c] sm:$0xf]
        %s1764 = scalar_lea.vmem %s4, 8
        %v1765 = vld [vmem:[%s1764] sm:$0xf]
        %v1766 = vld [vmem:[%s1764 + $0x4] sm:$0x3]
        %v1783 = vunpack.c.l.b16 %v1748
        %v1784 = vunpack.c.l.b16 %v1749
        %v1785 = vunpack.c.l.b16 %v1750
        %v1786 = vunpack.c.l.b16 %v1751
        %v1787 = vunpack.c.l.b16 %v1752
        %v1788 = vunpack.c.l.b16 %v1753
        %v1789 = vunpack.c.l.b16 %v1754
        %v1790 = vunpack.c.l.b16 %v1755
        %v1791 = vunpack.c.l.b16 %v1756
        %v1792 = vunpack.c.l.b16 %v1757
        %v1793 = vunpack.c.l.b16 %v1758
        %v1794 = vunpack.c.l.b16 %v1759
        %v1795 = vunpack.c.l.b16 %v1760
        %v1796 = vunpack.c.l.b16 %v1761
        %v1797 = vunpack.c.l.b16 %v1762
        %v1798 = vunpack.c.l.b16 %v1763
        %v1799 = vpack.c.b16 %v1784, %v1783
        %v1800 = vpack.c.b16 %v1786, %v1785
        %v1801 = vpack.c.b16 %v1788, %v1787
        %v1802 = vpack.c.b16 %v1790, %v1789
        %v1803 = vpack.c.b16 %v1792, %v1791
        %v1804 = vpack.c.b16 %v1794, %v1793
        %v1805 = vpack.c.b16 %v1796, %v1795
        %v1806 = vpack.c.b16 %v1798, %v1797
        %v1809 = vunpack.c.l.b16 %v1765
        %v1810 = vunpack.c.l.b16 %v1766
        %v1811 = vpack.c.b16 %v1810, %v1809
        %vm1812 = vcmask 97280
        %v1814 = vsel %vm1812, %v1799, 0
        %v1817 = vsel %vm1812, %v1800, 0
        %v1820 = vsel %vm1812, %v1801, 0
        %v1823 = vsel %vm1812, %v1802, 0
        %v1826 = vsel %vm1812, %v1803, 0
        %v1829 = vsel %vm1812, %v1804, 0
        %v1832 = vsel %vm1812, %v1805, 0
        %v1835 = vsel %vm1812, %v1806, 0
        %vm1837 = vcmask 1045504
        %v1839 = vsel %vm1837, %v1811, 0
        %1841 = vmatprep.subr.bf16.mxu0 0
        %1842 = vmatpush1.bf16.msra.mxu0 0
        %1843 = vmatprep.subr.bf16.mxu0 0
        %1844 = vmatpush1.bf16.msra.mxu0 0
        %1845 = vmatprep.subr.bf16.mxu0 0
        %1846 = vmatpush1.bf16.msra.mxu0 0
        %1847 = vmatprep.subr.bf16.mxu0 0
        %1848 = vmatpush1.bf16.msra.mxu0 0
        %1849 = vmatprep.subr.bf16.mxu0 0
        %1850 = vmatpush1.bf16.msra.mxu0 0
        %1851 = vmatprep.subr.bf16.mxu0 0
        %1852 = vmatpush1.bf16.msra.mxu0 0
        %1853 = vmatprep.subr.bf16.mxu0 0
        %1854 = vmatpush1.bf16.msra.mxu0 0
        %1855 = vmatprep.subr.bf16.mxu0 0
        %1856 = vmatpush1.bf16.msra.mxu0 %v1839
        %1857 = vmatprep.subr.bf16.mxu0 0
        %1858 = vmatpush2.bf16.msra.mxu0 0
        %1859 = vmatprep.subr.bf16.mxu0 0
        %1860 = vmatpush2.bf16.msra.mxu0 0
        %1861 = vmatprep.subr.bf16.mxu0 0
        %1862 = vmatpush2.bf16.msra.mxu0 0
        %1863 = vmatprep.subr.bf16.mxu0 0
        %1864 = vmatpush2.bf16.msra.mxu0 0
        %1865 = vmatprep.subr.bf16.mxu0 0
        %1866 = vmatpush2.bf16.msra.mxu0 0
        %1867 = vmatprep.subr.bf16.mxu0 0
        %1868 = vmatpush2.bf16.msra.mxu0 0
        %1869 = vmatprep.subr.bf16.mxu0 0
        %1870 = vmatpush2.bf16.msra.mxu0 0
        %1871 = vmatprep.subr.bf16.mxu0 0
        %1872 = vmatpush2.bf16.msra.mxu0 0
        %1873 = vmatprep.mubr.bf16.mxu0 0
        %1874 = vmatmul.mubr.bf16.gmra.mxu0 %v1814
        %v1875 = vpop.f32.mrf.mxu0
        %v1876 = vadd.f32 0.0, %v1875
        %v1877 = vpop.f32.mrf.mxu0
        %v1878 = vpop.f32.mrf.mxu0
        %v1879 = vadd.f32 0.0, %v1878
        %v1880 = vpop.f32.mrf.mxu0
        %1881 = vmatprep.mubr.bf16.mxu0 0
        %1882 = vmatmul.mubr.bf16.gmra.mxu0 %v1817
        %v1883 = vpop.f32.mrf.mxu0
        %v1884 = vadd.f32 0.0, %v1883
        %v1885 = vpop.f32.mrf.mxu0
        %v1886 = vpop.f32.mrf.mxu0
        %v1887 = vadd.f32 0.0, %v1886
        %v1888 = vpop.f32.mrf.mxu0
        %1889 = vmatprep.mubr.bf16.mxu0 0
        %1890 = vmatmul.mubr.bf16.gmra.mxu0 %v1820
        %v1891 = vpop.f32.mrf.mxu0
        %v1892 = vadd.f32 0.0, %v1891
        %v1893 = vpop.f32.mrf.mxu0
        %v1894 = vpop.f32.mrf.mxu0
        %v1895 = vadd.f32 0.0, %v1894
        %v1896 = vpop.f32.mrf.mxu0
        %1897 = vmatprep.mubr.bf16.mxu0 0
        %1898 = vmatmul.mubr.bf16.gmra.mxu0 %v1823
        %v1899 = vpop.f32.mrf.mxu0
        %v1900 = vadd.f32 0.0, %v1899
        %v1901 = vpop.f32.mrf.mxu0
        %v1902 = vpop.f32.mrf.mxu0
        %v1903 = vadd.f32 0.0, %v1902
        %v1904 = vpop.f32.mrf.mxu0
        %1905 = vmatprep.mubr.bf16.mxu0 0
        %1906 = vmatmul.mubr.bf16.gmra.mxu0 %v1826
        %v1907 = vpop.f32.mrf.mxu0
        %v1908 = vadd.f32 0.0, %v1907
        %v1909 = vpop.f32.mrf.mxu0
        %v1910 = vpop.f32.mrf.mxu0
        %v1911 = vadd.f32 0.0, %v1910
        %v1912 = vpop.f32.mrf.mxu0
        %1913 = vmatprep.mubr.bf16.mxu0 0
        %1914 = vmatmul.mubr.bf16.gmra.mxu0 %v1829
        %v1915 = vpop.f32.mrf.mxu0
        %v1916 = vadd.f32 0.0, %v1915
        %v1917 = vpop.f32.mrf.mxu0
        %v1918 = vpop.f32.mrf.mxu0
        %v1919 = vadd.f32 0.0, %v1918
        %v1920 = vpop.f32.mrf.mxu0
        %1921 = vmatprep.mubr.bf16.mxu0 0
        %1922 = vmatmul.mubr.bf16.gmra.mxu0 %v1832
        %v1923 = vpop.f32.mrf.mxu0
        %v1924 = vadd.f32 0.0, %v1923
        %v1925 = vpop.f32.mrf.mxu0
        %v1926 = vpop.f32.mrf.mxu0
        %v1927 = vadd.f32 0.0, %v1926
        %v1928 = vpop.f32.mrf.mxu0
        %1929 = vmatprep.mubr.bf16.mxu0 0
        %1930 = vmatmul.mubr.bf16.gmra.mxu0 %v1835
        %v1931 = vpop.f32.mrf.mxu0
        %v1932 = vadd.f32 0.0, %v1931
        %v1933 = vpop.f32.mrf.mxu0
        %v1934 = vpop.f32.mrf.mxu0
        %v1935 = vadd.f32 0.0, %v1934
        %v1936 = vpop.f32.mrf.mxu0
        %1937 = vdwg.mxu0
        %v1954 = vunpack.c.l.b16 %v1730
        %v1955 = vunpack.c.l.b16 %v1731
        %v1956 = vunpack.c.l.b16 %v1732
        %v1957 = vunpack.c.l.b16 %v1733
        %v1958 = vunpack.c.l.b16 %v1734
        %v1959 = vunpack.c.l.b16 %v1735
        %v1960 = vunpack.c.l.b16 %v1736
        %v1961 = vunpack.c.l.b16 %v1737
        %v1962 = vunpack.c.l.b16 %v1738
        %v1963 = vunpack.c.l.b16 %v1739
        %v1964 = vunpack.c.l.b16 %v1740
        %v1965 = vunpack.c.l.b16 %v1741
        %v1966 = vunpack.c.l.b16 %v1742
        %v1967 = vunpack.c.l.b16 %v1743
        %v1968 = vunpack.c.l.b16 %v1744
        %v1969 = vunpack.c.l.b16 %v1745
        %v1970 = vpack.c.b16 %v1955, %v1954
        %v1971 = vpack.c.b16 %v1957, %v1956
        %v1972 = vpack.c.b16 %v1959, %v1958
        %v1973 = vpack.c.b16 %v1961, %v1960
        %v1974 = vpack.c.b16 %v1963, %v1962
        %v1975 = vpack.c.b16 %v1965, %v1964
        %v1976 = vpack.c.b16 %v1967, %v1966
        %v1977 = vpack.c.b16 %v1969, %v1968
        %v1980 = vunpack.c.l.b16 %v1746
        %v1981 = vunpack.c.l.b16 %v1747
        %v1982 = vpack.c.b16 %v1981, %v1980
        %v1984 = vsel %vm1812, %v1970, 0
        %v1987 = vsel %vm1812, %v1971, 0
        %v1990 = vsel %vm1812, %v1972, 0
        %v1993 = vsel %vm1812, %v1973, 0
        %v1996 = vsel %vm1812, %v1974, 0
        %v1999 = vsel %vm1812, %v1975, 0
        %v2002 = vsel %vm1812, %v1976, 0
        %v2005 = vsel %vm1812, %v1977, 0
        %v2008 = vsel %vm1837, %v1982, 0
        %2010 = vmatprep.subr.bf16.mxu0 0
        %2011 = vmatpush1.bf16.msra.mxu0 0
        %2012 = vmatprep.subr.bf16.mxu0 0
        %2013 = vmatpush1.bf16.msra.mxu0 0
        %2014 = vmatprep.subr.bf16.mxu0 0
        %2015 = vmatpush1.bf16.msra.mxu0 0
        %2016 = vmatprep.subr.bf16.mxu0 0
        %2017 = vmatpush1.bf16.msra.mxu0 0
        %2018 = vmatprep.subr.bf16.mxu0 0
        %2019 = vmatpush1.bf16.msra.mxu0 0
        %2020 = vmatprep.subr.bf16.mxu0 0
        %2021 = vmatpush1.bf16.msra.mxu0 0
        %2022 = vmatprep.subr.bf16.mxu0 0
        %2023 = vmatpush1.bf16.msra.mxu0 0
        %2024 = vmatprep.subr.bf16.mxu0 0
        %2025 = vmatpush1.bf16.msra.mxu0 %v2008
        %2026 = vmatprep.subr.bf16.mxu0 0
        %2027 = vmatpush2.bf16.msra.mxu0 0
        %2028 = vmatprep.subr.bf16.mxu0 0
        %2029 = vmatpush2.bf16.msra.mxu0 0
        %2030 = vmatprep.subr.bf16.mxu0 0
        %2031 = vmatpush2.bf16.msra.mxu0 0
        %2032 = vmatprep.subr.bf16.mxu0 0
        %2033 = vmatpush2.bf16.msra.mxu0 0
        %2034 = vmatprep.subr.bf16.mxu0 0
        %2035 = vmatpush2.bf16.msra.mxu0 0
        %2036 = vmatprep.subr.bf16.mxu0 0
        %2037 = vmatpush2.bf16.msra.mxu0 0
        %2038 = vmatprep.subr.bf16.mxu0 0
        %2039 = vmatpush2.bf16.msra.mxu0 0
        %2040 = vmatprep.subr.bf16.mxu0 0
        %2041 = vmatpush2.bf16.msra.mxu0 0
        %2042 = vmatprep.mubr.bf16.mxu0 0
        %2043 = vmatmul.mubr.bf16.gmra.mxu0 %v1984
        %v2044 = vpop.f32.mrf.mxu0
        %v2045 = vadd.f32 %v1876, %v2044
        %v2046 = vpop.f32.mrf.mxu0
        %v2047 = vpop.f32.mrf.mxu0
        %v2048 = vadd.f32 %v1879, %v2047
        %v2049 = vpop.f32.mrf.mxu0
        %2050 = vmatprep.mubr.bf16.mxu0 0
        %2051 = vmatmul.mubr.bf16.gmra.mxu0 %v1987
        %v2052 = vpop.f32.mrf.mxu0
        %v2053 = vadd.f32 %v1884, %v2052
        %v2054 = vpop.f32.mrf.mxu0
        %v2055 = vpop.f32.mrf.mxu0
        %v2056 = vadd.f32 %v1887, %v2055
        %v2057 = vpop.f32.mrf.mxu0
        %2058 = vmatprep.mubr.bf16.mxu0 0
        %2059 = vmatmul.mubr.bf16.gmra.mxu0 %v1990
        %v2060 = vpop.f32.mrf.mxu0
        %v2061 = vadd.f32 %v1892, %v2060
        %v2062 = vpop.f32.mrf.mxu0
        %v2063 = vpop.f32.mrf.mxu0
        %v2064 = vadd.f32 %v1895, %v2063
        %v2065 = vpop.f32.mrf.mxu0
        %2066 = vmatprep.mubr.bf16.mxu0 0
        %2067 = vmatmul.mubr.bf16.gmra.mxu0 %v1993
        %v2068 = vpop.f32.mrf.mxu0
        %v2069 = vadd.f32 %v1900, %v2068
        %v2070 = vpop.f32.mrf.mxu0
        %v2071 = vpop.f32.mrf.mxu0
        %v2072 = vadd.f32 %v1903, %v2071
        %v2073 = vpop.f32.mrf.mxu0
        %2074 = vmatprep.mubr.bf16.mxu0 0
        %2075 = vmatmul.mubr.bf16.gmra.mxu0 %v1996
        %v2076 = vpop.f32.mrf.mxu0
        %v2077 = vadd.f32 %v1908, %v2076
        %v2078 = vpop.f32.mrf.mxu0
        %v2079 = vpop.f32.mrf.mxu0
        %v2080 = vadd.f32 %v1911, %v2079
        %v2081 = vpop.f32.mrf.mxu0
        %2082 = vmatprep.mubr.bf16.mxu0 0
        %2083 = vmatmul.mubr.bf16.gmra.mxu0 %v1999
        %v2084 = vpop.f32.mrf.mxu0
        %v2085 = vadd.f32 %v1916, %v2084
        %v2086 = vpop.f32.mrf.mxu0
        %v2087 = vpop.f32.mrf.mxu0
        %v2088 = vadd.f32 %v1919, %v2087
        %v2089 = vpop.f32.mrf.mxu0
        %2090 = vmatprep.mubr.bf16.mxu0 0
        %2091 = vmatmul.mubr.bf16.gmra.mxu0 %v2002
        %v2092 = vpop.f32.mrf.mxu0
        %v2093 = vadd.f32 %v1924, %v2092
        %v2094 = vpop.f32.mrf.mxu0
        %v2095 = vpop.f32.mrf.mxu0
        %v2096 = vadd.f32 %v1927, %v2095
        %v2097 = vpop.f32.mrf.mxu0
        %2098 = vmatprep.mubr.bf16.mxu0 0
        %2099 = vmatmul.mubr.bf16.gmra.mxu0 %v2005
        %v2100 = vpop.f32.mrf.mxu0
        %v2101 = vadd.f32 %v1932, %v2100
        %v2102 = vpop.f32.mrf.mxu0
        %v2103 = vpop.f32.mrf.mxu0
        %v2104 = vadd.f32 %v1935, %v2103
        %v2105 = vpop.f32.mrf.mxu0
        %2106 = vdwg.mxu0
        %s2107 = scalar_lea.vmem [#allocation2], 16
        %v2108 = vld [vmem:[%s2107] sm:$0xf]
        %v2109 = vld [vmem:[%s2107 + $0x4] sm:$0xf]
        %v2110 = vld [vmem:[%s2107 + $0x8] sm:$0xf]
        %v2111 = vld [vmem:[%s2107 + $0xc] sm:$0xf]
        %v2112 = vld [vmem:[%s2107 + $0x10] sm:$0xf]
        %v2113 = vld [vmem:[%s2107 + $0x14] sm:$0xf]
        %v2114 = vld [vmem:[%s2107 + $0x18] sm:$0xf]
        %v2115 = vld [vmem:[%s2107 + $0x1c] sm:$0xf]
        %v2116 = vld [vmem:[%s2107 + $0x20] sm:$0xf]
        %v2117 = vld [vmem:[%s2107 + $0x24] sm:$0xf]
        %v2118 = vld [vmem:[%s2107 + $0x28] sm:$0xf]
        %v2119 = vld [vmem:[%s2107 + $0x2c] sm:$0xf]
        %v2120 = vld [vmem:[%s2107 + $0x30] sm:$0xf]
        %v2121 = vld [vmem:[%s2107 + $0x34] sm:$0xf]
        %v2122 = vld [vmem:[%s2107 + $0x38] sm:$0xf]
        %v2123 = vld [vmem:[%s2107 + $0x3c] sm:$0xf]
        %s2124 = scalar_lea.vmem %s4, 16
        %v2125 = vld [vmem:[%s2124] sm:$0xf]
        %v2126 = vld [vmem:[%s2124 + $0x4] sm:$0x3]
        %v2143 = vunpack.c.l.b16 %v2108
        %v2144 = vunpack.c.l.b16 %v2109
        %v2145 = vunpack.c.l.b16 %v2110
        %v2146 = vunpack.c.l.b16 %v2111
        %v2147 = vunpack.c.l.b16 %v2112
        %v2148 = vunpack.c.l.b16 %v2113
        %v2149 = vunpack.c.l.b16 %v2114
        %v2150 = vunpack.c.l.b16 %v2115
        %v2151 = vunpack.c.l.b16 %v2116
        %v2152 = vunpack.c.l.b16 %v2117
        %v2153 = vunpack.c.l.b16 %v2118
        %v2154 = vunpack.c.l.b16 %v2119
        %v2155 = vunpack.c.l.b16 %v2120
        %v2156 = vunpack.c.l.b16 %v2121
        %v2157 = vunpack.c.l.b16 %v2122
        %v2158 = vunpack.c.l.b16 %v2123
        %v2159 = vpack.c.b16 %v2144, %v2143
        %v2160 = vpack.c.b16 %v2146, %v2145
        %v2161 = vpack.c.b16 %v2148, %v2147
        %v2162 = vpack.c.b16 %v2150, %v2149
        %v2163 = vpack.c.b16 %v2152, %v2151
        %v2164 = vpack.c.b16 %v2154, %v2153
        %v2165 = vpack.c.b16 %v2156, %v2155
        %v2166 = vpack.c.b16 %v2158, %v2157
        %v2169 = vunpack.c.l.b16 %v2125
        %v2170 = vunpack.c.l.b16 %v2126
        %v2171 = vpack.c.b16 %v2170, %v2169
        %v2173 = vsel %vm1812, %v2159, 0
        %v2176 = vsel %vm1812, %v2160, 0
        %v2179 = vsel %vm1812, %v2161, 0
        %v2182 = vsel %vm1812, %v2162, 0
        %v2185 = vsel %vm1812, %v2163, 0
        %v2188 = vsel %vm1812, %v2164, 0
        %v2191 = vsel %vm1812, %v2165, 0
        %v2194 = vsel %vm1812, %v2166, 0
        %v2197 = vsel %vm1837, %v2171, 0
        %2199 = vmatprep.subr.bf16.mxu0 0
        %2200 = vmatpush1.bf16.msra.mxu0 0
        %2201 = vmatprep.subr.bf16.mxu0 0
        %2202 = vmatpush1.bf16.msra.mxu0 0
        %2203 = vmatprep.subr.bf16.mxu0 0
        %2204 = vmatpush1.bf16.msra.mxu0 0
        %2205 = vmatprep.subr.bf16.mxu0 0
        %2206 = vmatpush1.bf16.msra.mxu0 0
        %2207 = vmatprep.subr.bf16.mxu0 0
        %2208 = vmatpush1.bf16.msra.mxu0 0
        %2209 = vmatprep.subr.bf16.mxu0 0
        %2210 = vmatpush1.bf16.msra.mxu0 0
        %2211 = vmatprep.subr.bf16.mxu0 0
        %2212 = vmatpush1.bf16.msra.mxu0 0
        %2213 = vmatprep.subr.bf16.mxu0 0
        %2214 = vmatpush1.bf16.msra.mxu0 %v2197
        %2215 = vmatprep.subr.bf16.mxu0 0
        %2216 = vmatpush2.bf16.msra.mxu0 0
        %2217 = vmatprep.subr.bf16.mxu0 0
        %2218 = vmatpush2.bf16.msra.mxu0 0
        %2219 = vmatprep.subr.bf16.mxu0 0
        %2220 = vmatpush2.bf16.msra.mxu0 0
        %2221 = vmatprep.subr.bf16.mxu0 0
        %2222 = vmatpush2.bf16.msra.mxu0 0
        %2223 = vmatprep.subr.bf16.mxu0 0
        %2224 = vmatpush2.bf16.msra.mxu0 0
        %2225 = vmatprep.subr.bf16.mxu0 0
        %2226 = vmatpush2.bf16.msra.mxu0 0
        %2227 = vmatprep.subr.bf16.mxu0 0
        %2228 = vmatpush2.bf16.msra.mxu0 0
        %2229 = vmatprep.subr.bf16.mxu0 0
        %2230 = vmatpush2.bf16.msra.mxu0 0
        %2231 = vmatprep.mubr.bf16.mxu0 0
        %2232 = vmatmul.mubr.bf16.gmra.mxu0 %v2173
        %v2233 = vpop.f32.mrf.mxu0
        %v2234 = vadd.f32 0.0, %v2233
        %v2235 = vpop.f32.mrf.mxu0
        %v2236 = vpop.f32.mrf.mxu0
        %v2237 = vadd.f32 0.0, %v2236
        %v2238 = vpop.f32.mrf.mxu0
        %2239 = vmatprep.mubr.bf16.mxu0 0
        %2240 = vmatmul.mubr.bf16.gmra.mxu0 %v2176
        %v2241 = vpop.f32.mrf.mxu0
        %v2242 = vadd.f32 0.0, %v2241
        %v2243 = vpop.f32.mrf.mxu0
        %v2244 = vpop.f32.mrf.mxu0
        %v2245 = vadd.f32 0.0, %v2244
        %v2246 = vpop.f32.mrf.mxu0
        %2247 = vmatprep.mubr.bf16.mxu0 0
        %2248 = vmatmul.mubr.bf16.gmra.mxu0 %v2179
        %v2249 = vpop.f32.mrf.mxu0
        %v2250 = vadd.f32 0.0, %v2249
        %v2251 = vpop.f32.mrf.mxu0
        %v2252 = vpop.f32.mrf.mxu0
        %v2253 = vadd.f32 0.0, %v2252
        %v2254 = vpop.f32.mrf.mxu0
        %2255 = vmatprep.mubr.bf16.mxu0 0
        %2256 = vmatmul.mubr.bf16.gmra.mxu0 %v2182
        %v2257 = vpop.f32.mrf.mxu0
        %v2258 = vadd.f32 0.0, %v2257
        %v2259 = vpop.f32.mrf.mxu0
        %v2260 = vpop.f32.mrf.mxu0
        %v2261 = vadd.f32 0.0, %v2260
        %v2262 = vpop.f32.mrf.mxu0
        %2263 = vmatprep.mubr.bf16.mxu0 0
        %2264 = vmatmul.mubr.bf16.gmra.mxu0 %v2185
        %v2265 = vpop.f32.mrf.mxu0
        %v2266 = vadd.f32 0.0, %v2265
        %v2267 = vpop.f32.mrf.mxu0
        %v2268 = vpop.f32.mrf.mxu0
        %v2269 = vadd.f32 0.0, %v2268
        %v2270 = vpop.f32.mrf.mxu0
        %2271 = vmatprep.mubr.bf16.mxu0 0
        %2272 = vmatmul.mubr.bf16.gmra.mxu0 %v2188
        %v2273 = vpop.f32.mrf.mxu0
        %v2274 = vadd.f32 0.0, %v2273
        %v2275 = vpop.f32.mrf.mxu0
        %v2276 = vpop.f32.mrf.mxu0
        %v2277 = vadd.f32 0.0, %v2276
        %v2278 = vpop.f32.mrf.mxu0
        %2279 = vmatprep.mubr.bf16.mxu0 0
        %2280 = vmatmul.mubr.bf16.gmra.mxu0 %v2191
        %v2281 = vpop.f32.mrf.mxu0
        %v2282 = vadd.f32 0.0, %v2281
        %v2283 = vpop.f32.mrf.mxu0
        %v2284 = vpop.f32.mrf.mxu0
        %v2285 = vadd.f32 0.0, %v2284
        %v2286 = vpop.f32.mrf.mxu0
        %2287 = vmatprep.mubr.bf16.mxu0 0
        %2288 = vmatmul.mubr.bf16.gmra.mxu0 %v2194
        %v2289 = vpop.f32.mrf.mxu0
        %v2290 = vadd.f32 0.0, %v2289
        %v2291 = vpop.f32.mrf.mxu0
        %v2292 = vpop.f32.mrf.mxu0
        %v2293 = vadd.f32 0.0, %v2292
        %v2294 = vpop.f32.mrf.mxu0
        %2295 = vdwg.mxu0
        %v2296 = vadd.f32 %v2045, %v2234
        %v2297 = vadd.f32 %v2048, %v2237
        %v2298 = vadd.f32 %v2053, %v2242
        %v2299 = vadd.f32 %v2056, %v2245
        %v2300 = vadd.f32 %v2061, %v2250
        %v2301 = vadd.f32 %v2064, %v2253
        %v2302 = vadd.f32 %v2069, %v2258
        %v2303 = vadd.f32 %v2072, %v2261
        %v2304 = vadd.f32 %v2077, %v2266
        %v2305 = vadd.f32 %v2080, %v2269
        %v2306 = vadd.f32 %v2085, %v2274
        %v2307 = vadd.f32 %v2088, %v2277
        %v2308 = vadd.f32 %v2093, %v2282
        %v2309 = vadd.f32 %v2096, %v2285
        %v2310 = vadd.f32 %v2101, %v2290
        %v2311 = vadd.f32 %v2104, %v2293
        %v2312 = vld [vmem:[%s8] sm:$0x1]
        %v2314 = vlaneseq
        %v2315 = vshrl.u32 %v2314, 7
        %v2316 = vsub.s32 0, %v2315
        %v2317 = vrot.slane %v2312, %v2316
        %v2319 = vmul.f32 %v2296, %v2317
        %v2320 = vmul.f32 %v2297, %v2317
        %v2321 = vmul.f32 %v2298, %v2317
        %v2322 = vmul.f32 %v2299, %v2317
        %v2323 = vmul.f32 %v2300, %v2317
        %v2324 = vmul.f32 %v2301, %v2317
        %v2325 = vmul.f32 %v2302, %v2317
        %v2326 = vmul.f32 %v2303, %v2317
        %v2327 = vmul.f32 %v2304, %v2317
        %v2328 = vmul.f32 %v2305, %v2317
        %v2329 = vmul.f32 %v2306, %v2317
        %v2330 = vmul.f32 %v2307, %v2317
        %v2331 = vmul.f32 %v2308, %v2317
        %v2332 = vmul.f32 %v2309, %v2317
        %v2333 = vmul.f32 %v2310, %v2317
        %v2334 = vmul.f32 %v2311, %v2317
        %v2335 = vld [vmem:[%s9] sm:$0x1]
        %v2337 = vlaneseq
        %v2338 = vshrl.u32 %v2337, 7
        %v2339 = vsub.s32 0, %v2338
        %v2340 = vrot.slane %v2335, %v2339
        %v2342 = vadd.f32 %v2319, %v2340
        %v2343 = vadd.f32 %v2320, %v2340
        %v2344 = vadd.f32 %v2321, %v2340
        %v2345 = vadd.f32 %v2322, %v2340
        %v2346 = vadd.f32 %v2323, %v2340
        %v2347 = vadd.f32 %v2324, %v2340
        %v2348 = vadd.f32 %v2325, %v2340
        %v2349 = vadd.f32 %v2326, %v2340
        %v2350 = vadd.f32 %v2327, %v2340
        %v2351 = vadd.f32 %v2328, %v2340
        %v2352 = vadd.f32 %v2329, %v2340
        %v2353 = vadd.f32 %v2330, %v2340
        %v2354 = vadd.f32 %v2331, %v2340
        %v2355 = vadd.f32 %v2332, %v2340
        %v2356 = vadd.f32 %v2333, %v2340
        %v2357 = vadd.f32 %v2334, %v2340
        %v2358 = vmax.f32 %v2342, 0.0
        %v2359 = vmax.f32 %v2343, 0.0
        %v2360 = vmax.f32 %v2344, 0.0
        %v2361 = vmax.f32 %v2345, 0.0
        %v2362 = vmax.f32 %v2346, 0.0
        %v2363 = vmax.f32 %v2347, 0.0
        %v2364 = vmax.f32 %v2348, 0.0
        %v2365 = vmax.f32 %v2349, 0.0
        %v2366 = vmax.f32 %v2350, 0.0
        %v2367 = vmax.f32 %v2351, 0.0
        %v2368 = vmax.f32 %v2352, 0.0
        %v2369 = vmax.f32 %v2353, 0.0
        %v2370 = vmax.f32 %v2354, 0.0
        %v2371 = vmax.f32 %v2355, 0.0
        %v2372 = vmax.f32 %v2356, 0.0
        %v2373 = vmax.f32 %v2357, 0.0
        %v2374 = vpack.c.bf16 %v2359, %v2358
        %v2375 = vpack.c.bf16 %v2361, %v2360
        %v2376 = vpack.c.bf16 %v2363, %v2362
        %v2377 = vpack.c.bf16 %v2365, %v2364
        %v2378 = vpack.c.bf16 %v2367, %v2366
        %v2379 = vpack.c.bf16 %v2369, %v2368
        %v2380 = vpack.c.bf16 %v2371, %v2370
        %v2381 = vpack.c.bf16 %v2373, %v2372
        %v2382 = vld [vmem:[%s5] sm:$0x3]
        %v2384 = vsel %vm1350, %v2374, 0
        %v2387 = vsel %vm1350, %v2375, 0
        %v2390 = vsel %vm1350, %v2376, 0
        %v2393 = vsel %vm1350, %v2377, 0
        %v2396 = vsel %vm1350, %v2378, 0
        %v2399 = vsel %vm1350, %v2379, 0
        %v2402 = vsel %vm1350, %v2380, 0
        %v2405 = vsel %vm1350, %v2381, 0
        %vm2407 = vcmask 1041408
        %v2409 = vsel %vm2407, %v2382, 0
        %2411 = vmatprep.subr.bf16.mxu0 0
        %2412 = vmatpush1.bf16.msra.mxu0 0
        %2413 = vmatprep.subr.bf16.mxu0 0
        %2414 = vmatpush1.bf16.msra.mxu0 0
        %2415 = vmatprep.subr.bf16.mxu0 0
        %2416 = vmatpush1.bf16.msra.mxu0 0
        %2417 = vmatprep.subr.bf16.mxu0 0
        %2418 = vmatpush1.bf16.msra.mxu0 0
        %2419 = vmatprep.subr.bf16.mxu0 0
        %2420 = vmatpush1.bf16.msra.mxu0 0
        %2421 = vmatprep.subr.bf16.mxu0 0
        %2422 = vmatpush1.bf16.msra.mxu0 0
        %2423 = vmatprep.subr.bf16.mxu0 0
        %2424 = vmatpush1.bf16.msra.mxu0 0
        %2425 = vmatprep.subr.bf16.mxu0 0
        %2426 = vmatpush1.bf16.msra.mxu0 %v2409
        %2427 = vmatprep.subr.bf16.mxu0 0
        %2428 = vmatpush2.bf16.msra.mxu0 0
        %2429 = vmatprep.subr.bf16.mxu0 0
        %2430 = vmatpush2.bf16.msra.mxu0 0
        %2431 = vmatprep.subr.bf16.mxu0 0
        %2432 = vmatpush2.bf16.msra.mxu0 0
        %2433 = vmatprep.subr.bf16.mxu0 0
        %2434 = vmatpush2.bf16.msra.mxu0 0
        %2435 = vmatprep.subr.bf16.mxu0 0
        %2436 = vmatpush2.bf16.msra.mxu0 0
        %2437 = vmatprep.subr.bf16.mxu0 0
        %2438 = vmatpush2.bf16.msra.mxu0 0
        %2439 = vmatprep.subr.bf16.mxu0 0
        %2440 = vmatpush2.bf16.msra.mxu0 0
        %2441 = vmatprep.subr.bf16.mxu0 0
        %2442 = vmatpush2.bf16.msra.mxu0 0
        %2443 = vmatprep.mubr.bf16.mxu0 0
        %2444 = vmatmul.mubr.bf16.gmra.mxu0 %v2384
        %v2445 = vpop.f32.mrf.mxu0
        %v2446 = vadd.f32 0.0, %v2445
        %v2447 = vpop.f32.mrf.mxu0
        %v2448 = vpop.f32.mrf.mxu0
        %v2449 = vadd.f32 0.0, %v2448
        %v2450 = vpop.f32.mrf.mxu0
        %2451 = vmatprep.mubr.bf16.mxu0 0
        %2452 = vmatmul.mubr.bf16.gmra.mxu0 %v2387
        %v2453 = vpop.f32.mrf.mxu0
        %v2454 = vadd.f32 0.0, %v2453
        %v2455 = vpop.f32.mrf.mxu0
        %v2456 = vpop.f32.mrf.mxu0
        %v2457 = vadd.f32 0.0, %v2456
        %v2458 = vpop.f32.mrf.mxu0
        %2459 = vmatprep.mubr.bf16.mxu0 0
        %2460 = vmatmul.mubr.bf16.gmra.mxu0 %v2390
        %v2461 = vpop.f32.mrf.mxu0
        %v2462 = vadd.f32 0.0, %v2461
        %v2463 = vpop.f32.mrf.mxu0
        %v2464 = vpop.f32.mrf.mxu0
        %v2465 = vadd.f32 0.0, %v2464
        %v2466 = vpop.f32.mrf.mxu0
        %2467 = vmatprep.mubr.bf16.mxu0 0
        %2468 = vmatmul.mubr.bf16.gmra.mxu0 %v2393
        %v2469 = vpop.f32.mrf.mxu0
        %v2470 = vadd.f32 0.0, %v2469
        %v2471 = vpop.f32.mrf.mxu0
        %v2472 = vpop.f32.mrf.mxu0
        %v2473 = vadd.f32 0.0, %v2472
        %v2474 = vpop.f32.mrf.mxu0
        %2475 = vmatprep.mubr.bf16.mxu0 0
        %2476 = vmatmul.mubr.bf16.gmra.mxu0 %v2396
        %v2477 = vpop.f32.mrf.mxu0
        %v2478 = vadd.f32 0.0, %v2477
        %v2479 = vpop.f32.mrf.mxu0
        %v2480 = vpop.f32.mrf.mxu0
        %v2481 = vadd.f32 0.0, %v2480
        %v2482 = vpop.f32.mrf.mxu0
        %2483 = vmatprep.mubr.bf16.mxu0 0
        %2484 = vmatmul.mubr.bf16.gmra.mxu0 %v2399
        %v2485 = vpop.f32.mrf.mxu0
        %v2486 = vadd.f32 0.0, %v2485
        %v2487 = vpop.f32.mrf.mxu0
        %v2488 = vpop.f32.mrf.mxu0
        %v2489 = vadd.f32 0.0, %v2488
        %v2490 = vpop.f32.mrf.mxu0
        %2491 = vmatprep.mubr.bf16.mxu0 0
        %2492 = vmatmul.mubr.bf16.gmra.mxu0 %v2402
        %v2493 = vpop.f32.mrf.mxu0
        %v2494 = vadd.f32 0.0, %v2493
        %v2495 = vpop.f32.mrf.mxu0
        %v2496 = vpop.f32.mrf.mxu0
        %v2497 = vadd.f32 0.0, %v2496
        %v2498 = vpop.f32.mrf.mxu0
        %2499 = vmatprep.mubr.bf16.mxu0 0
        %2500 = vmatmul.mubr.bf16.gmra.mxu0 %v2405
        %v2501 = vpop.f32.mrf.mxu0
        %v2502 = vadd.f32 0.0, %v2501
        %v2503 = vpop.f32.mrf.mxu0
        %v2504 = vpop.f32.mrf.mxu0
        %v2505 = vadd.f32 0.0, %v2504
        %v2506 = vpop.f32.mrf.mxu0
        %2507 = vdwg.mxu0
        %v2508 = vld [vmem:[%s10] sm:$0x1]
        %v2510 = vlaneseq
        %v2511 = vshrl.u32 %v2510, 7
        %v2512 = vsub.s32 0, %v2511
        %v2513 = vrot.slane %v2508, %v2512
        %v2515 = vmul.f32 %v2446, %v2513
        %v2516 = vmul.f32 %v2449, %v2513
        %v2517 = vmul.f32 %v2454, %v2513
        %v2518 = vmul.f32 %v2457, %v2513
        %v2519 = vmul.f32 %v2462, %v2513
        %v2520 = vmul.f32 %v2465, %v2513
        %v2521 = vmul.f32 %v2470, %v2513
        %v2522 = vmul.f32 %v2473, %v2513
        %v2523 = vmul.f32 %v2478, %v2513
        %v2524 = vmul.f32 %v2481, %v2513
        %v2525 = vmul.f32 %v2486, %v2513
        %v2526 = vmul.f32 %v2489, %v2513
        %v2527 = vmul.f32 %v2494, %v2513
        %v2528 = vmul.f32 %v2497, %v2513
        %v2529 = vmul.f32 %v2502, %v2513
        %v2530 = vmul.f32 %v2505, %v2513
        %v2531 = vld [vmem:[%s11] sm:$0x1]
        %v2533 = vlaneseq
        %v2534 = vshrl.u32 %v2533, 7
        %v2535 = vsub.s32 0, %v2534
        %v2536 = vrot.slane %v2531, %v2535
        %v2538 = vadd.f32 %v2515, %v2536
        %v2539 = vadd.f32 %v2516, %v2536
        %v2540 = vadd.f32 %v2517, %v2536
        %v2541 = vadd.f32 %v2518, %v2536
        %v2542 = vadd.f32 %v2519, %v2536
        %v2543 = vadd.f32 %v2520, %v2536
        %v2544 = vadd.f32 %v2521, %v2536
        %v2545 = vadd.f32 %v2522, %v2536
        %v2546 = vadd.f32 %v2523, %v2536
        %v2547 = vadd.f32 %v2524, %v2536
        %v2548 = vadd.f32 %v2525, %v2536
        %v2549 = vadd.f32 %v2526, %v2536
        %v2550 = vadd.f32 %v2527, %v2536
        %v2551 = vadd.f32 %v2528, %v2536
        %v2552 = vadd.f32 %v2529, %v2536
        %v2553 = vadd.f32 %v2530, %v2536
        %v2554 = vld [vmem:[%s500] sm:$0xf]
        %v2555 = vld [vmem:[%s500 + $0x4] sm:$0xf]
        %v2556 = vld [vmem:[%s500 + $0x8] sm:$0xf]
        %v2557 = vld [vmem:[%s500 + $0xc] sm:$0xf]
        %v2558 = vld [vmem:[%s500 + $0x10] sm:$0xf]
        %v2559 = vld [vmem:[%s500 + $0x14] sm:$0xf]
        %v2560 = vld [vmem:[%s500 + $0x18] sm:$0xf]
        %v2561 = vld [vmem:[%s500 + $0x1c] sm:$0xf]
        %v2562 = vld [vmem:[%s500 + $0x20] sm:$0xf]
        %v2563 = vld [vmem:[%s500 + $0x24] sm:$0xf]
        %v2564 = vld [vmem:[%s500 + $0x28] sm:$0xf]
        %v2565 = vld [vmem:[%s500 + $0x2c] sm:$0xf]
        %v2566 = vld [vmem:[%s500 + $0x30] sm:$0xf]
        %v2567 = vld [vmem:[%s500 + $0x34] sm:$0xf]
        %v2568 = vld [vmem:[%s500 + $0x38] sm:$0xf]
        %v2569 = vld [vmem:[%s500 + $0x3c] sm:$0xf]
        %v2570 = vunpack.c.l.bf16 %v2554
        %v2571 = vunpack.c.l.bf16 %v2555
        %v2572 = vunpack.c.l.bf16 %v2556
        %v2573 = vunpack.c.l.bf16 %v2557
        %v2574 = vunpack.c.l.bf16 %v2558
        %v2575 = vunpack.c.l.bf16 %v2559
        %v2576 = vunpack.c.l.bf16 %v2560
        %v2577 = vunpack.c.l.bf16 %v2561
        %v2578 = vunpack.c.l.bf16 %v2562
        %v2579 = vunpack.c.l.bf16 %v2563
        %v2580 = vunpack.c.l.bf16 %v2564
        %v2581 = vunpack.c.l.bf16 %v2565
        %v2582 = vunpack.c.l.bf16 %v2566
        %v2583 = vunpack.c.l.bf16 %v2567
        %v2584 = vunpack.c.l.bf16 %v2568
        %v2585 = vunpack.c.l.bf16 %v2569
        %v2586 = vadd.f32 %v2538, %v2570
        %v2587 = vadd.f32 %v2539, %v2571
        %v2588 = vadd.f32 %v2540, %v2572
        %v2589 = vadd.f32 %v2541, %v2573
        %v2590 = vadd.f32 %v2542, %v2574
        %v2591 = vadd.f32 %v2543, %v2575
        %v2592 = vadd.f32 %v2544, %v2576
        %v2593 = vadd.f32 %v2545, %v2577
        %v2594 = vadd.f32 %v2546, %v2578
        %v2595 = vadd.f32 %v2547, %v2579
        %v2596 = vadd.f32 %v2548, %v2580
        %v2597 = vadd.f32 %v2549, %v2581
        %v2598 = vadd.f32 %v2550, %v2582
        %v2599 = vadd.f32 %v2551, %v2583
        %v2600 = vadd.f32 %v2552, %v2584
        %v2601 = vadd.f32 %v2553, %v2585
        %v2602 = vmax.f32 %v2586, 0.0
        %v2603 = vmax.f32 %v2587, 0.0
        %v2604 = vmax.f32 %v2588, 0.0
        %v2605 = vmax.f32 %v2589, 0.0
        %v2606 = vmax.f32 %v2590, 0.0
        %v2607 = vmax.f32 %v2591, 0.0
        %v2608 = vmax.f32 %v2592, 0.0
        %v2609 = vmax.f32 %v2593, 0.0
        %v2610 = vmax.f32 %v2594, 0.0
        %v2611 = vmax.f32 %v2595, 0.0
        %v2612 = vmax.f32 %v2596, 0.0
        %v2613 = vmax.f32 %v2597, 0.0
        %v2614 = vmax.f32 %v2598, 0.0
        %v2615 = vmax.f32 %v2599, 0.0
        %v2616 = vmax.f32 %v2600, 0.0
        %v2617 = vmax.f32 %v2601, 0.0
        %v2618 = vpack.c.bf16 %v2603, %v2602
        %v2619 = vpack.c.bf16 %v2605, %v2604
        %v2620 = vpack.c.bf16 %v2607, %v2606
        %v2621 = vpack.c.bf16 %v2609, %v2608
        %v2622 = vpack.c.bf16 %v2611, %v2610
        %v2623 = vpack.c.bf16 %v2613, %v2612
        %v2624 = vpack.c.bf16 %v2615, %v2614
        %v2625 = vpack.c.bf16 %v2617, %v2616
        %v2634 = vunpack.c.l.b16 %v2618
        %v2635 = vunpack.c.h.b16 %v2618
        %v2636 = vunpack.c.l.b16 %v2619
        %v2637 = vunpack.c.h.b16 %v2619
        %v2638 = vunpack.c.l.b16 %v2620
        %v2639 = vunpack.c.h.b16 %v2620
        %v2640 = vunpack.c.l.b16 %v2621
        %v2641 = vunpack.c.h.b16 %v2621
        %v2642 = vunpack.c.l.b16 %v2622
        %v2643 = vunpack.c.h.b16 %v2622
        %v2644 = vunpack.c.l.b16 %v2623
        %v2645 = vunpack.c.h.b16 %v2623
        %v2646 = vunpack.c.l.b16 %v2624
        %v2647 = vunpack.c.h.b16 %v2624
        %v2648 = vunpack.c.l.b16 %v2625
        %v2649 = vunpack.c.h.b16 %v2625
        %v2650 = vpack.c.b16 %v2634, %v2634
        %v2651 = vpack.c.b16 %v2635, %v2635
        %v2652 = vpack.c.b16 %v2636, %v2636
        %v2653 = vpack.c.b16 %v2637, %v2637
        %v2654 = vpack.c.b16 %v2638, %v2638
        %v2655 = vpack.c.b16 %v2639, %v2639
        %v2656 = vpack.c.b16 %v2640, %v2640
        %v2657 = vpack.c.b16 %v2641, %v2641
        %v2658 = vpack.c.b16 %v2642, %v2642
        %v2659 = vpack.c.b16 %v2643, %v2643
        %v2660 = vpack.c.b16 %v2644, %v2644
        %v2661 = vpack.c.b16 %v2645, %v2645
        %v2662 = vpack.c.b16 %v2646, %v2646
        %v2663 = vpack.c.b16 %v2647, %v2647
        %v2664 = vpack.c.b16 %v2648, %v2648
        %v2665 = vpack.c.b16 %v2649, %v2649
        %vm2682 = vcmask 125952
        %2683 = vst.msk [vmem:[%s559] sm:$0xf] %vm2682, %v2650
        %2684 = vst.msk [vmem:[%s559 + $0x4] sm:$0xf] %vm2682, %v2651
        %2685 = vst.msk [vmem:[%s559 + $0x8] sm:$0xf] %vm2682, %v2652
        %2686 = vst.msk [vmem:[%s559 + $0xc] sm:$0xf] %vm2682, %v2653
        %2687 = vst.msk [vmem:[%s559 + $0x10] sm:$0xf] %vm2682, %v2654
        %2688 = vst.msk [vmem:[%s559 + $0x14] sm:$0xf] %vm2682, %v2655
        %2689 = vst.msk [vmem:[%s559 + $0x18] sm:$0xf] %vm2682, %v2656
        %2690 = vst.msk [vmem:[%s559 + $0x1c] sm:$0xf] %vm2682, %v2657
        %2691 = vst.msk [vmem:[%s559 + $0x20] sm:$0xf] %vm2682, %v2658
        %2692 = vst.msk [vmem:[%s559 + $0x24] sm:$0xf] %vm2682, %v2659
        %2693 = vst.msk [vmem:[%s559 + $0x28] sm:$0xf] %vm2682, %v2660
        %2694 = vst.msk [vmem:[%s559 + $0x2c] sm:$0xf] %vm2682, %v2661
        %2695 = vst.msk [vmem:[%s559 + $0x30] sm:$0xf] %vm2682, %v2662
        %2696 = vst.msk [vmem:[%s559 + $0x34] sm:$0xf] %vm2682, %v2663
        %2697 = vst.msk [vmem:[%s559 + $0x38] sm:$0xf] %vm2682, %v2664
        %2698 = vst.msk [vmem:[%s559 + $0x3c] sm:$0xf] %vm2682, %v2665
        %s2699 = sand.u32 %s343, 1
        %s2700 = scalar_lea.sflag [#allocation5], %s2699
        %s2701 = sand.u32 %s343, 1
        %s2702 = smul.addr %s2701, 64
        %s2703 = scalar_lea.vmem [#allocation9], %s2702
        // Predicated region
        $region97: #{tpu_custom_call.1} parent=67 // pred_check
          %p2704 = pneg %p353
        $region98: #{tpu_custom_call.1} parent=67 // pred_check_branch
          %2706 = sbr.rel (%p2704) target = $region100
        $region99: #{tpu_custom_call.1} parent=67 // pred_region
          %s2707 = smul.u32 8, %s37
          %s2709 = ssub.s32 1024, 1024
          %2710 = vsyncadd %s2700, %s2709
          %s2711 = smul.addr %s2707, 2
          %s2712 = smul.addr %s36, 32
          %s2713 = sadd.s32 %s2711, %s2712
          %s2714 = smul.addr %s2713, 64
          %s2715 = scalar_lea.hbm %s12, %s2714
          %s2716 = sshll.u32 %s2703, 4
          %s2717 = int_to_ptr.vmem [resolvable:$true] %s2716
          %2722 = dma.vmem_to_hbm [thread:$0]  %s2717, 1024, %s2715, %s2700, 64, 64, 4
        $region100: #{tpu_custom_call.1} parent=67 // pred_fallthru
          _
      $region68: #{tpu_custom_call.1} parent=5 // pred_fallthru
        _
      %p2723 = scmp.le.s32.totalorder 2, %s27
      // Predicated region
      $region101: #{tpu_custom_call.1} parent=5 // pred_check
        %p2724 = pneg %p2723
      $region102: #{tpu_custom_call.1} parent=5 // pred_check_branch
        %2726 = sbr.rel (%p2724) target = $region104
      $region103: #{tpu_custom_call.1} parent=5 // pred_region
        %s2727 = ssub.s32 %s27, 2
        // Predicated region
        $region105: #{tpu_custom_call.1} parent=103 // pred_check
          %p2728 = pneg %p359
        $region106: #{tpu_custom_call.1} parent=103 // pred_check_branch
          %2730 = sbr.rel (%p2728) target = $region108
        $region107: #{tpu_custom_call.1} parent=103 // pred_region
          %s2731 = sand.u32 %s344, 1
          %s2732 = scalar_lea.sflag [#allocation5], %s2731
          %s2733 = sand.u32 %s344, 1
          %s2734 = smul.addr %s2733, 64
          %s2735 = scalar_lea.vmem [#allocation9], %s2734
          %2736 = dma.done %s2732, 1024
        $region108: #{tpu_custom_call.1} parent=103 // pred_fallthru
          _
      $region104: #{tpu_custom_call.1} parent=5 // pred_fallthru
        _
    $region6: #{tpu_custom_call.1} parent=1 // loop_footer
      %s31 = sadd.s32 1, %s27
    $region7: #{tpu_custom_call.1} parent=1 // loop_footer_branch
      %26 = sbr.rel target = $region3
    $region8: #{tpu_custom_call.1} parent=1 // loop_exit
      _
    %2737 = vsyncpa [#allocation4], 1
    %s2738 = scalar_lea.sflag [#allocation4], 1
    %2739 = vsyncpa %s2738, 1
    %2740 = vsyncpa [#allocation7], 1
    %s2741 = scalar_lea.sflag [#allocation7], 1
    %2742 = vsyncpa %s2741, 1
    %2743 = vsyncpa [#allocation5], 1
    %s2744 = scalar_lea.sflag [#allocation5], 1
    %2745 = vsyncpa %s2744, 1

</llo_original>
